<compile_context>
chip_gen: v5e
topology: v5e:2x2
jax: 0.10.0
libtpu: 0.0.40
codegen_flags: <defaults>
</compile_context>

<pallas_src>
import jax
import jax.numpy as jnp
import numpy as np
from jax.experimental import pallas as pl
from jax.experimental.pallas import tpu as pltpu


# ---------------------------------------------------------------------------
# Single fused kernel: input projection + 25-step tanh recurrence + fused head.
# ---------------------------------------------------------------------------
def fused_rnn_kernel(x_ref, h0_ref, w_ih_t_ref, w_hh_t_ref, b_ref,
                     w_head_ref, b_head_ref,
                     out_ref, conf_ref, hidden_ref,
                     xp_scr, hist_scr):
    B = h0_ref.shape[1]
    H = w_hh_t_ref.shape[0]
    T = x_ref.shape[0] // B
    O = out_ref.shape[1]

    # Hoisted input projection for all timesteps in one MXU pass (bf16 inputs,
    # f32 accumulation); both RNN biases folded in so the loop body is only
    # vmatmul -> add -> tanh.
    xp_scr[...] = (jnp.dot(x_ref[...].astype(jnp.bfloat16), w_ih_t_ref[...],
                           preferred_element_type=jnp.float32)
                   + b_ref[...])

    w_hh_t = w_hh_t_ref[...]             # bf16 (H, H), stays in vregs
    h = h0_ref[0]                        # f32 (B, H)

    # Statically unrolled recurrence (T is a compile-time constant).  The only
    # MXU op on the critical path is the single-pass bf16 HxH matmul.
    for t in range(T):
        pre = xp_scr[t * B:(t + 1) * B, :] + jnp.dot(
            h.astype(jnp.bfloat16), w_hh_t, preferred_element_type=jnp.float32)
        h = jnp.tanh(pre)
        # Build concat(output1[0..T-1], axis=-1) incrementally; these stores
        # are off the serial dependence chain.
        hist_scr[:, t * H:(t + 1) * H] = h

    hidden_ref[0] = h                    # final hidden == last timestep output

    # Both Linear heads as ONE post-loop (B, T*H) x (T*H, O+C) matmul.
    heads = (jnp.dot(hist_scr[...].astype(jnp.bfloat16), w_head_ref[...],
                     preferred_element_type=jnp.float32)
             + b_head_ref[...])
    out_ref[...] = heads[:, :O]
    conf_ref[...] = heads[:, O:]


# ---------------------------------------------------------------------------
# One-time parameter preparation (outside the hot path).
# ---------------------------------------------------------------------------
def prepare_params(params, seq_len=25):
    H = params["w_hh"].shape[0]
    O = params["w_out"].shape[0]
    C = params["w_conf"].shape[0]
    del seq_len  # implied by w_out's (O, 25*H) shape
    # Fuse both heads: (25*H, O) ++ (25*H, C) -> (25*H, O+C).
    w_head = jnp.concatenate([params["w_out"].T, params["w_conf"].T], axis=1)
    b_head = jnp.concatenate([params["b_out"], params["b_conf"]]).reshape(1, O + C)
    return {
        "w_ih_t": params["w_ih"].T.astype(jnp.bfloat16),              # (I, H)
        "w_hh_t": params["w_hh"].T.astype(jnp.bfloat16),              # (H, H)
        "b": (params["b_ih"] + params["b_hh"]).reshape(1, H).astype(jnp.float32),
        "w_head": w_head.astype(jnp.bfloat16),                        # (25*H, O+C)
        "b_head": b_head.astype(jnp.float32),                         # (1, O+C)
    }


# ---------------------------------------------------------------------------
# Full forward, mirroring RNN_multi_task.forward -> (output, confidence, hidden)
# ---------------------------------------------------------------------------
def rnn_multi_task_forward(x, h0, prep, output_size):
    T, B, I = x.shape
    H = prep["w_hh_t"].shape[0]
    OC = prep["w_head"].shape[1]
    O = output_size
    C = OC - O
    assert T * H == prep["w_head"].shape[0], "seq_len must match head weights (T=25)"
    assert B % 8 == 0, "batch should be a multiple of 8 for aligned sublane slices"

    x_flat = x.reshape(T * B, I)     # free row-major view, no data movement
    vmem_spec = pl.BlockSpec(memory_space=pltpu.MemorySpace.VMEM)

    out, conf, hidden = pl.pallas_call(
        fused_rnn_kernel,
        out_shape=(jax.ShapeDtypeStruct((B, O), jnp.float32),
                   jax.ShapeDtypeStruct((B, C), jnp.float32),
                   jax.ShapeDtypeStruct((1, B, H), jnp.float32)),
        in_specs=[vmem_spec] * 7,
        out_specs=(vmem_spec, vmem_spec, vmem_spec),
        scratch_shapes=[pltpu.VMEM((T * B, H), jnp.float32),   # x-projection
                        pltpu.VMEM((B, T * H), jnp.float32)],  # h_t history
    )(x_flat, h0, prep["w_ih_t"], prep["w_hh_t"], prep["b"],
      prep["w_head"], prep["b_head"])
    return out, conf, hidden


# ---------------------------------------------------------------------------
# Pure-JAX reference (lax.scan, full f32) for correctness checking.
# ---------------------------------------------------------------------------
def reference_forward(x, h0, params):
    def step(h, x_t):
        h_new = jnp.tanh(x_t @ params["w_ih"].T + params["b_ih"]
                         + h @ params["w_hh"].T + params["b_hh"])
        return h_new, h_new
    h_final, outs = jax.lax.scan(step, h0[0], x)
    B = x.shape[1]
    output2 = jnp.transpose(outs, (1, 0, 2)).reshape(B, -1)
    out = output2 @ params["w_out"].T + params["b_out"]
    conf = output2 @ params["w_conf"].T + params["b_conf"]
    return out, conf, h_final[None]


def init_params(key, input_size, hidden_size, output_size):
    ks = jax.random.split(key, 8)
    s = 1.0 / np.sqrt(hidden_size)
    F = 25 * hidden_size
    return {
        "w_ih":  jax.random.uniform(ks[0], (hidden_size, input_size), jnp.float32, -s, s),
        "w_hh":  jax.random.uniform(ks[1], (hidden_size, hidden_size), jnp.float32, -s, s),
        "b_ih":  jax.random.uniform(ks[2], (hidden_size,), jnp.float32, -s, s),
        "b_hh":  jax.random.uniform(ks[3], (hidden_size,), jnp.float32, -s, s),
        "w_out": jax.random.uniform(ks[4], (output_size, F), jnp.float32, -s, s),
        "b_out": jax.random.uniform(ks[5], (output_size,), jnp.float32, -s, s),
        "w_conf": jax.random.uniform(ks[6], (25, F), jnp.float32, -s, s),
        "b_conf": jax.random.uniform(ks[7], (25,), jnp.float32, -s, s),
    }


if __name__ == "__main__":
    T = 25            # forward concatenates output1[0..24] -> seq len must be 25
    B = 8             # sublane-aligned batch (multiple of 8)
    INPUT_SIZE = 16
    HIDDEN_SIZE = 32
    OUTPUT_SIZE = 12

    key = jax.random.PRNGKey(0)
    k_x, k_h, k_p = jax.random.split(key, 3)
    x = jax.random.normal(k_x, (T, B, INPUT_SIZE), jnp.float32)
    h0 = jax.random.normal(k_h, (1, B, HIDDEN_SIZE), jnp.float32)
    params = init_params(k_p, INPUT_SIZE, HIDDEN_SIZE, OUTPUT_SIZE)
    prep = prepare_params(params, seq_len=T)

    out, conf, hidden = jax.block_until_ready(
        rnn_multi_task_forward(x, h0, prep, OUTPUT_SIZE))

    ref_out, ref_conf, ref_hidden = reference_forward(x, h0, params)
    assert out.shape == (B, OUTPUT_SIZE)
    assert conf.shape == (B, 25)
    assert hidden.shape == (1, B, HIDDEN_SIZE)
    # bf16 MXU operands (f32 accumulation) over a 25-step recurrence -> relax
    # tolerance vs. the pure-f32 reference.
    np.testing.assert_allclose(np.asarray(out), np.asarray(ref_out), rtol=3e-2, atol=3e-2)
    np.testing.assert_allclose(np.asarray(conf), np.asarray(ref_conf), rtol=3e-2, atol=3e-2)
    np.testing.assert_allclose(np.asarray(hidden), np.asarray(ref_hidden), rtol=3e-2, atol=3e-2)

    print("KERNEL_OK")
</pallas_src>

<mosaic_0001>
module attributes {stable_mosaic.version = 11 : i64} {
  func.func @fused_rnn_kernel(%arg0: memref<200x16xf32, #tpu.memory_space<vmem>>, %arg1: memref<1x8x32xf32, #tpu.memory_space<vmem>>, %arg2: memref<16x32xbf16, #tpu.memory_space<vmem>>, %arg3: memref<32x32xbf16, #tpu.memory_space<vmem>>, %arg4: memref<1x32xf32, #tpu.memory_space<vmem>>, %arg5: memref<800x37xbf16, #tpu.memory_space<vmem>>, %arg6: memref<1x37xf32, #tpu.memory_space<vmem>>, %arg7: memref<8x12xf32, #tpu.memory_space<vmem>>, %arg8: memref<8x25xf32, #tpu.memory_space<vmem>>, %arg9: memref<1x8x32xf32, #tpu.memory_space<vmem>>, %arg10: memref<200x32xf32, #tpu.memory_space<vmem>>, %arg11: memref<8x800xf32, #tpu.memory_space<vmem>>) attributes {dimension_semantics = [], scalar_prefetch = 0 : i64, scratch_operands = 2 : i64, tpu.core_type = #tpu.core_type<tc>} {
    %c0 = arith.constant 0 : index
    %c0_0 = arith.constant 0 : index
    %0 = vector.load %arg0[%c0, %c0_0] : memref<200x16xf32, #tpu.memory_space<vmem>>, vector<200x16xf32>
    %1 = arith.truncf %0 : vector<200x16xf32> to vector<200x16xbf16>
    %c0_1 = arith.constant 0 : index
    %c0_2 = arith.constant 0 : index
    %2 = vector.load %arg2[%c0_1, %c0_2] : memref<16x32xbf16, #tpu.memory_space<vmem>>, vector<16x32xbf16>
    %cst = arith.constant dense<0.000000e+00> : vector<200x32xf32>
    %3 = tpu.matmul %1, %2, %cst {dimension_numbers = #tpu.dot_dimension_numbers<[1], [0], [0], [1], [0, 0, 1, 1], [], []>} : vector<200x16xbf16>, vector<16x32xbf16>, vector<200x32xf32> -> vector<200x32xf32>
    %c0_3 = arith.constant 0 : index
    %c0_4 = arith.constant 0 : index
    %4 = vector.load %arg4[%c0_3, %c0_4] : memref<1x32xf32, #tpu.memory_space<vmem>>, vector<1x32xf32>
    %5 = vector.broadcast %4 : vector<1x32xf32> to vector<200x32xf32>
    %6 = arith.addf %3, %5 : vector<200x32xf32>
    %c0_5 = arith.constant 0 : index
    %c0_6 = arith.constant 0 : index
    %7 = vector.load %arg10[%c0_5, %c0_6] : memref<200x32xf32, #tpu.memory_space<vmem>>, vector<200x32xf32>
    tpu.vector_store %arg10[%c0_5, %c0_6], %6 {strides = array<i32>} : memref<200x32xf32, #tpu.memory_space<vmem>>, vector<200x32xf32>,
    %c0_7 = arith.constant 0 : index
    %c0_8 = arith.constant 0 : index
    %8 = vector.load %arg3[%c0_7, %c0_8] : memref<32x32xbf16, #tpu.memory_space<vmem>>, vector<32x32xbf16>
    %c0_9 = arith.constant 0 : index
    %c0_10 = arith.constant 0 : index
    %c0_11 = arith.constant 0 : index
    %9 = vector.load %arg1[%c0_9, %c0_10, %c0_11] : memref<1x8x32xf32, #tpu.memory_space<vmem>>, vector<1x8x32xf32>
    %10 = vector.shape_cast %9 : vector<1x8x32xf32> to vector<8x32xf32>
    %c0_12 = arith.constant 0 : index
    %c0_13 = arith.constant 0 : index
    %11 = vector.load %arg10[%c0_12, %c0_13] : memref<200x32xf32, #tpu.memory_space<vmem>>, vector<8x32xf32>
    %12 = arith.truncf %10 : vector<8x32xf32> to vector<8x32xbf16>
    %cst_14 = arith.constant dense<0.000000e+00> : vector<8x32xf32>
    %13 = tpu.matmul %12, %8, %cst_14 {dimension_numbers = #tpu.dot_dimension_numbers<[1], [0], [0], [1], [0, 0, 1, 1], [], []>} : vector<8x32xbf16>, vector<32x32xbf16>, vector<8x32xf32> -> vector<8x32xf32>
    %14 = arith.addf %11, %13 : vector<8x32xf32>
    %15 = math.tanh %14 : vector<8x32xf32>
    %c0_15 = arith.constant 0 : index
    %c0_16 = arith.constant 0 : index
    %16 = vector.load %arg11[%c0_15, %c0_16] : memref<8x800xf32, #tpu.memory_space<vmem>>, vector<8x32xf32>
    tpu.vector_store %arg11[%c0_15, %c0_16], %15 {strides = array<i32>} : memref<8x800xf32, #tpu.memory_space<vmem>>, vector<8x32xf32>,
    %c8 = arith.constant 8 : index
    %c0_17 = arith.constant 0 : index
    %17 = vector.load %arg10[%c8, %c0_17] : memref<200x32xf32, #tpu.memory_space<vmem>>, vector<8x32xf32>
    %18 = arith.truncf %15 : vector<8x32xf32> to vector<8x32xbf16>
    %cst_18 = arith.constant dense<0.000000e+00> : vector<8x32xf32>
    %19 = tpu.matmul %18, %8, %cst_18 {dimension_numbers = #tpu.dot_dimension_numbers<[1], [0], [0], [1], [0, 0, 1, 1], [], []>} : vector<8x32xbf16>, vector<32x32xbf16>, vector<8x32xf32> -> vector<8x32xf32>
    %20 = arith.addf %17, %19 : vector<8x32xf32>
    %21 = math.tanh %20 : vector<8x32xf32>
    %c0_19 = arith.constant 0 : index
    %c32 = arith.constant 32 : index
    %22 = vector.load %arg11[%c0_19, %c32] : memref<8x800xf32, #tpu.memory_space<vmem>>, vector<8x32xf32>
    tpu.vector_store %arg11[%c0_19, %c32], %21 {strides = array<i32>} : memref<8x800xf32, #tpu.memory_space<vmem>>, vector<8x32xf32>,
    %c16 = arith.constant 16 : index
    %c0_20 = arith.constant 0 : index
    %23 = vector.load %arg10[%c16, %c0_20] : memref<200x32xf32, #tpu.memory_space<vmem>>, vector<8x32xf32>
    %24 = arith.truncf %21 : vector<8x32xf32> to vector<8x32xbf16>
    %cst_21 = arith.constant dense<0.000000e+00> : vector<8x32xf32>
    %25 = tpu.matmul %24, %8, %cst_21 {dimension_numbers = #tpu.dot_dimension_numbers<[1], [0], [0], [1], [0, 0, 1, 1], [], []>} : vector<8x32xbf16>, vector<32x32xbf16>, vector<8x32xf32> -> vector<8x32xf32>
    %26 = arith.addf %23, %25 : vector<8x32xf32>
    %27 = math.tanh %26 : vector<8x32xf32>
    %c0_22 = arith.constant 0 : index
    %c64 = arith.constant 64 : index
    %28 = vector.load %arg11[%c0_22, %c64] : memref<8x800xf32, #tpu.memory_space<vmem>>, vector<8x32xf32>
    tpu.vector_store %arg11[%c0_22, %c64], %27 {strides = array<i32>} : memref<8x800xf32, #tpu.memory_space<vmem>>, vector<8x32xf32>,
    %c24 = arith.constant 24 : index
    %c0_23 = arith.constant 0 : index
    %29 = vector.load %arg10[%c24, %c0_23] : memref<200x32xf32, #tpu.memory_space<vmem>>, vector<8x32xf32>
    %30 = arith.truncf %27 : vector<8x32xf32> to vector<8x32xbf16>
    %cst_24 = arith.constant dense<0.000000e+00> : vector<8x32xf32>
    %31 = tpu.matmul %30, %8, %cst_24 {dimension_numbers = #tpu.dot_dimension_numbers<[1], [0], [0], [1], [0, 0, 1, 1], [], []>} : vector<8x32xbf16>, vector<32x32xbf16>, vector<8x32xf32> -> vector<8x32xf32>
    %32 = arith.addf %29, %31 : vector<8x32xf32>
    %33 = math.tanh %32 : vector<8x32xf32>
    %c0_25 = arith.constant 0 : index
    %c96 = arith.constant 96 : index
    %34 = vector.load %arg11[%c0_25, %c96] : memref<8x800xf32, #tpu.memory_space<vmem>>, vector<8x32xf32>
    tpu.vector_store %arg11[%c0_25, %c96], %33 {strides = array<i32>} : memref<8x800xf32, #tpu.memory_space<vmem>>, vector<8x32xf32>,
    %c32_26 = arith.constant 32 : index
    %c0_27 = arith.constant 0 : index
    %35 = vector.load %arg10[%c32_26, %c0_27] : memref<200x32xf32, #tpu.memory_space<vmem>>, vector<8x32xf32>
    %36 = arith.truncf %33 : vector<8x32xf32> to vector<8x32xbf16>
    %cst_28 = arith.constant dense<0.000000e+00> : vector<8x32xf32>
    %37 = tpu.matmul %36, %8, %cst_28 {dimension_numbers = #tpu.dot_dimension_numbers<[1], [0], [0], [1], [0, 0, 1, 1], [], []>} : vector<8x32xbf16>, vector<32x32xbf16>, vector<8x32xf32> -> vector<8x32xf32>
    %38 = arith.addf %35, %37 : vector<8x32xf32>
    %39 = math.tanh %38 : vector<8x32xf32>
    %c0_29 = arith.constant 0 : index
    %c128 = arith.constant 128 : index
    %40 = vector.load %arg11[%c0_29, %c128] : memref<8x800xf32, #tpu.memory_space<vmem>>, vector<8x32xf32>
    tpu.vector_store %arg11[%c0_29, %c128], %39 {strides = array<i32>} : memref<8x800xf32, #tpu.memory_space<vmem>>, vector<8x32xf32>,
    %c40 = arith.constant 40 : index
    %c0_30 = arith.constant 0 : index
    %41 = vector.load %arg10[%c40, %c0_30] : memref<200x32xf32, #tpu.memory_space<vmem>>, vector<8x32xf32>
    %42 = arith.truncf %39 : vector<8x32xf32> to vector<8x32xbf16>
    %cst_31 = arith.constant dense<0.000000e+00> : vector<8x32xf32>
    %43 = tpu.matmul %42, %8, %cst_31 {dimension_numbers = #tpu.dot_dimension_numbers<[1], [0], [0], [1], [0, 0, 1, 1], [], []>} : vector<8x32xbf16>, vector<32x32xbf16>, vector<8x32xf32> -> vector<8x32xf32>
    %44 = arith.addf %41, %43 : vector<8x32xf32>
    %45 = math.tanh %44 : vector<8x32xf32>
    %c0_32 = arith.constant 0 : index
    %c160 = arith.constant 160 : index
    %46 = vector.load %arg11[%c0_32, %c160] : memref<8x800xf32, #tpu.memory_space<vmem>>, vector<8x32xf32>
    tpu.vector_store %arg11[%c0_32, %c160], %45 {strides = array<i32>} : memref<8x800xf32, #tpu.memory_space<vmem>>, vector<8x32xf32>,
    %c48 = arith.constant 48 : index
    %c0_33 = arith.constant 0 : index
    %47 = vector.load %arg10[%c48, %c0_33] : memref<200x32xf32, #tpu.memory_space<vmem>>, vector<8x32xf32>
    %48 = arith.truncf %45 : vector<8x32xf32> to vector<8x32xbf16>
    %cst_34 = arith.constant dense<0.000000e+00> : vector<8x32xf32>
    %49 = tpu.matmul %48, %8, %cst_34 {dimension_numbers = #tpu.dot_dimension_numbers<[1], [0], [0], [1], [0, 0, 1, 1], [], []>} : vector<8x32xbf16>, vector<32x32xbf16>, vector<8x32xf32> -> vector<8x32xf32>
    %50 = arith.addf %47, %49 : vector<8x32xf32>
    %51 = math.tanh %50 : vector<8x32xf32>
    %c0_35 = arith.constant 0 : index
    %c192 = arith.constant 192 : index
    %52 = vector.load %arg11[%c0_35, %c192] : memref<8x800xf32, #tpu.memory_space<vmem>>, vector<8x32xf32>
    tpu.vector_store %arg11[%c0_35, %c192], %51 {strides = array<i32>} : memref<8x800xf32, #tpu.memory_space<vmem>>, vector<8x32xf32>,
    %c56 = arith.constant 56 : index
    %c0_36 = arith.constant 0 : index
    %53 = vector.load %arg10[%c56, %c0_36] : memref<200x32xf32, #tpu.memory_space<vmem>>, vector<8x32xf32>
    %54 = arith.truncf %51 : vector<8x32xf32> to vector<8x32xbf16>
    %cst_37 = arith.constant dense<0.000000e+00> : vector<8x32xf32>
    %55 = tpu.matmul %54, %8, %cst_37 {dimension_numbers = #tpu.dot_dimension_numbers<[1], [0], [0], [1], [0, 0, 1, 1], [], []>} : vector<8x32xbf16>, vector<32x32xbf16>, vector<8x32xf32> -> vector<8x32xf32>
    %56 = arith.addf %53, %55 : vector<8x32xf32>
    %57 = math.tanh %56 : vector<8x32xf32>
    %c0_38 = arith.constant 0 : index
    %c224 = arith.constant 224 : index
    %58 = vector.load %arg11[%c0_38, %c224] : memref<8x800xf32, #tpu.memory_space<vmem>>, vector<8x32xf32>
    tpu.vector_store %arg11[%c0_38, %c224], %57 {strides = array<i32>} : memref<8x800xf32, #tpu.memory_space<vmem>>, vector<8x32xf32>,
    %c64_39 = arith.constant 64 : index
    %c0_40 = arith.constant 0 : index
    %59 = vector.load %arg10[%c64_39, %c0_40] : memref<200x32xf32, #tpu.memory_space<vmem>>, vector<8x32xf32>
    %60 = arith.truncf %57 : vector<8x32xf32> to vector<8x32xbf16>
    %cst_41 = arith.constant dense<0.000000e+00> : vector<8x32xf32>
    %61 = tpu.matmul %60, %8, %cst_41 {dimension_numbers = #tpu.dot_dimension_numbers<[1], [0], [0], [1], [0, 0, 1, 1], [], []>} : vector<8x32xbf16>, vector<32x32xbf16>, vector<8x32xf32> -> vector<8x32xf32>
    %62 = arith.addf %59, %61 : vector<8x32xf32>
    %63 = math.tanh %62 : vector<8x32xf32>
    %c0_42 = arith.constant 0 : index
    %c256 = arith.constant 256 : index
    %64 = vector.load %arg11[%c0_42, %c256] : memref<8x800xf32, #tpu.memory_space<vmem>>, vector<8x32xf32>
    tpu.vector_store %arg11[%c0_42, %c256], %63 {strides = array<i32>} : memref<8x800xf32, #tpu.memory_space<vmem>>, vector<8x32xf32>,
    %c72 = arith.constant 72 : index
    %c0_43 = arith.constant 0 : index
    %65 = vector.load %arg10[%c72, %c0_43] : memref<200x32xf32, #tpu.memory_space<vmem>>, vector<8x32xf32>
    %66 = arith.truncf %63 : vector<8x32xf32> to vector<8x32xbf16>
    %cst_44 = arith.constant dense<0.000000e+00> : vector<8x32xf32>
    %67 = tpu.matmul %66, %8, %cst_44 {dimension_numbers = #tpu.dot_dimension_numbers<[1], [0], [0], [1], [0, 0, 1, 1], [], []>} : vector<8x32xbf16>, vector<32x32xbf16>, vector<8x32xf32> -> vector<8x32xf32>
    %68 = arith.addf %65, %67 : vector<8x32xf32>
    %69 = math.tanh %68 : vector<8x32xf32>
    %c0_45 = arith.constant 0 : index
    %c288 = arith.constant 288 : index
    %70 = vector.load %arg11[%c0_45, %c288] : memref<8x800xf32, #tpu.memory_space<vmem>>, vector<8x32xf32>
    tpu.vector_store %arg11[%c0_45, %c288], %69 {strides = array<i32>} : memref<8x800xf32, #tpu.memory_space<vmem>>, vector<8x32xf32>,
    %c80 = arith.constant 80 : index
    %c0_46 = arith.constant 0 : index
    %71 = vector.load %arg10[%c80, %c0_46] : memref<200x32xf32, #tpu.memory_space<vmem>>, vector<8x32xf32>
    %72 = arith.truncf %69 : vector<8x32xf32> to vector<8x32xbf16>
    %cst_47 = arith.constant dense<0.000000e+00> : vector<8x32xf32>
    %73 = tpu.matmul %72, %8, %cst_47 {dimension_numbers = #tpu.dot_dimension_numbers<[1], [0], [0], [1], [0, 0, 1, 1], [], []>} : vector<8x32xbf16>, vector<32x32xbf16>, vector<8x32xf32> -> vector<8x32xf32>
    %74 = arith.addf %71, %73 : vector<8x32xf32>
    %75 = math.tanh %74 : vector<8x32xf32>
    %c0_48 = arith.constant 0 : index
    %c320 = arith.constant 320 : index
    %76 = vector.load %arg11[%c0_48, %c320] : memref<8x800xf32, #tpu.memory_space<vmem>>, vector<8x32xf32>
    tpu.vector_store %arg11[%c0_48, %c320], %75 {strides = array<i32>} : memref<8x800xf32, #tpu.memory_space<vmem>>, vector<8x32xf32>,
    %c88 = arith.constant 88 : index
    %c0_49 = arith.constant 0 : index
    %77 = vector.load %arg10[%c88, %c0_49] : memref<200x32xf32, #tpu.memory_space<vmem>>, vector<8x32xf32>
    %78 = arith.truncf %75 : vector<8x32xf32> to vector<8x32xbf16>
    %cst_50 = arith.constant dense<0.000000e+00> : vector<8x32xf32>
    %79 = tpu.matmul %78, %8, %cst_50 {dimension_numbers = #tpu.dot_dimension_numbers<[1], [0], [0], [1], [0, 0, 1, 1], [], []>} : vector<8x32xbf16>, vector<32x32xbf16>, vector<8x32xf32> -> vector<8x32xf32>
    %80 = arith.addf %77, %79 : vector<8x32xf32>
    %81 = math.tanh %80 : vector<8x32xf32>
    %c0_51 = arith.constant 0 : index
    %c352 = arith.constant 352 : index
    %82 = vector.load %arg11[%c0_51, %c352] : memref<8x800xf32, #tpu.memory_space<vmem>>, vector<8x32xf32>
    tpu.vector_store %arg11[%c0_51, %c352], %81 {strides = array<i32>} : memref<8x800xf32, #tpu.memory_space<vmem>>, vector<8x32xf32>,
    %c96_52 = arith.constant 96 : index
    %c0_53 = arith.constant 0 : index
    %83 = vector.load %arg10[%c96_52, %c0_53] : memref<200x32xf32, #tpu.memory_space<vmem>>, vector<8x32xf32>
    %84 = arith.truncf %81 : vector<8x32xf32> to vector<8x32xbf16>
    %cst_54 = arith.constant dense<0.000000e+00> : vector<8x32xf32>
    %85 = tpu.matmul %84, %8, %cst_54 {dimension_numbers = #tpu.dot_dimension_numbers<[1], [0], [0], [1], [0, 0, 1, 1], [], []>} : vector<8x32xbf16>, vector<32x32xbf16>, vector<8x32xf32> -> vector<8x32xf32>
    %86 = arith.addf %83, %85 : vector<8x32xf32>
    %87 = math.tanh %86 : vector<8x32xf32>
    %c0_55 = arith.constant 0 : index
    %c384 = arith.constant 384 : index
    %88 = vector.load %arg11[%c0_55, %c384] : memref<8x800xf32, #tpu.memory_space<vmem>>, vector<8x32xf32>
    tpu.vector_store %arg11[%c0_55, %c384], %87 {strides = array<i32>} : memref<8x800xf32, #tpu.memory_space<vmem>>, vector<8x32xf32>,
    %c104 = arith.constant 104 : index
    %c0_56 = arith.constant 0 : index
    %89 = vector.load %arg10[%c104, %c0_56] : memref<200x32xf32, #tpu.memory_space<vmem>>, vector<8x32xf32>
    %90 = arith.truncf %87 : vector<8x32xf32> to vector<8x32xbf16>
    %cst_57 = arith.constant dense<0.000000e+00> : vector<8x32xf32>
    %91 = tpu.matmul %90, %8, %cst_57 {dimension_numbers = #tpu.dot_dimension_numbers<[1], [0], [0], [1], [0, 0, 1, 1], [], []>} : vector<8x32xbf16>, vector<32x32xbf16>, vector<8x32xf32> -> vector<8x32xf32>
    %92 = arith.addf %89, %91 : vector<8x32xf32>
    %93 = math.tanh %92 : vector<8x32xf32>
    %c0_58 = arith.constant 0 : index
    %c416 = arith.constant 416 : index
    %94 = vector.load %arg11[%c0_58, %c416] : memref<8x800xf32, #tpu.memory_space<vmem>>, vector<8x32xf32>
    tpu.vector_store %arg11[%c0_58, %c416], %93 {strides = array<i32>} : memref<8x800xf32, #tpu.memory_space<vmem>>, vector<8x32xf32>,
    %c112 = arith.constant 112 : index
    %c0_59 = arith.constant 0 : index
    %95 = vector.load %arg10[%c112, %c0_59] : memref<200x32xf32, #tpu.memory_space<vmem>>, vector<8x32xf32>
    %96 = arith.truncf %93 : vector<8x32xf32> to vector<8x32xbf16>
    %cst_60 = arith.constant dense<0.000000e+00> : vector<8x32xf32>
    %97 = tpu.matmul %96, %8, %cst_60 {dimension_numbers = #tpu.dot_dimension_numbers<[1], [0], [0], [1], [0, 0, 1, 1], [], []>} : vector<8x32xbf16>, vector<32x32xbf16>, vector<8x32xf32> -> vector<8x32xf32>
    %98 = arith.addf %95, %97 : vector<8x32xf32>
    %99 = math.tanh %98 : vector<8x32xf32>
    %c0_61 = arith.constant 0 : index
    %c448 = arith.constant 448 : index
    %100 = vector.load %arg11[%c0_61, %c448] : memref<8x800xf32, #tpu.memory_space<vmem>>, vector<8x32xf32>
    tpu.vector_store %arg11[%c0_61, %c448], %99 {strides = array<i32>} : memref<8x800xf32, #tpu.memory_space<vmem>>, vector<8x32xf32>,
    %c120 = arith.constant 120 : index
    %c0_62 = arith.constant 0 : index
    %101 = vector.load %arg10[%c120, %c0_62] : memref<200x32xf32, #tpu.memory_space<vmem>>, vector<8x32xf32>
    %102 = arith.truncf %99 : vector<8x32xf32> to vector<8x32xbf16>
    %cst_63 = arith.constant dense<0.000000e+00> : vector<8x32xf32>
    %103 = tpu.matmul %102, %8, %cst_63 {dimension_numbers = #tpu.dot_dimension_numbers<[1], [0], [0], [1], [0, 0, 1, 1], [], []>} : vector<8x32xbf16>, vector<32x32xbf16>, vector<8x32xf32> -> vector<8x32xf32>
    %104 = arith.addf %101, %103 : vector<8x32xf32>
    %105 = math.tanh %104 : vector<8x32xf32>
    %c0_64 = arith.constant 0 : index
    %c480 = arith.constant 480 : index
    %106 = vector.load %arg11[%c0_64, %c480] : memref<8x800xf32, #tpu.memory_space<vmem>>, vector<8x32xf32>
    tpu.vector_store %arg11[%c0_64, %c480], %105 {strides = array<i32>} : memref<8x800xf32, #tpu.memory_space<vmem>>, vector<8x32xf32>,
    %c128_65 = arith.constant 128 : index
    %c0_66 = arith.constant 0 : index
    %107 = vector.load %arg10[%c128_65, %c0_66] : memref<200x32xf32, #tpu.memory_space<vmem>>, vector<8x32xf32>
    %108 = arith.truncf %105 : vector<8x32xf32> to vector<8x32xbf16>
    %cst_67 = arith.constant dense<0.000000e+00> : vector<8x32xf32>
    %109 = tpu.matmul %108, %8, %cst_67 {dimension_numbers = #tpu.dot_dimension_numbers<[1], [0], [0], [1], [0, 0, 1, 1], [], []>} : vector<8x32xbf16>, vector<32x32xbf16>, vector<8x32xf32> -> vector<8x32xf32>
    %110 = arith.addf %107, %109 : vector<8x32xf32>
    %111 = math.tanh %110 : vector<8x32xf32>
    %c0_68 = arith.constant 0 : index
    %c512 = arith.constant 512 : index
    %112 = vector.load %arg11[%c0_68, %c512] : memref<8x800xf32, #tpu.memory_space<vmem>>, vector<8x32xf32>
    tpu.vector_store %arg11[%c0_68, %c512], %111 {strides = array<i32>} : memref<8x800xf32, #tpu.memory_space<vmem>>, vector<8x32xf32>,
    %c136 = arith.constant 136 : index
    %c0_69 = arith.constant 0 : index
    %113 = vector.load %arg10[%c136, %c0_69] : memref<200x32xf32, #tpu.memory_space<vmem>>, vector<8x32xf32>
    %114 = arith.truncf %111 : vector<8x32xf32> to vector<8x32xbf16>
    %cst_70 = arith.constant dense<0.000000e+00> : vector<8x32xf32>
    %115 = tpu.matmul %114, %8, %cst_70 {dimension_numbers = #tpu.dot_dimension_numbers<[1], [0], [0], [1], [0, 0, 1, 1], [], []>} : vector<8x32xbf16>, vector<32x32xbf16>, vector<8x32xf32> -> vector<8x32xf32>
    %116 = arith.addf %113, %115 : vector<8x32xf32>
    %117 = math.tanh %116 : vector<8x32xf32>
    %c0_71 = arith.constant 0 : index
    %c544 = arith.constant 544 : index
    %118 = vector.load %arg11[%c0_71, %c544] : memref<8x800xf32, #tpu.memory_space<vmem>>, vector<8x32xf32>
    tpu.vector_store %arg11[%c0_71, %c544], %117 {strides = array<i32>} : memref<8x800xf32, #tpu.memory_space<vmem>>, vector<8x32xf32>,
    %c144 = arith.constant 144 : index
    %c0_72 = arith.constant 0 : index
    %119 = vector.load %arg10[%c144, %c0_72] : memref<200x32xf32, #tpu.memory_space<vmem>>, vector<8x32xf32>
    %120 = arith.truncf %117 : vector<8x32xf32> to vector<8x32xbf16>
    %cst_73 = arith.constant dense<0.000000e+00> : vector<8x32xf32>
    %121 = tpu.matmul %120, %8, %cst_73 {dimension_numbers = #tpu.dot_dimension_numbers<[1], [0], [0], [1], [0, 0, 1, 1], [], []>} : vector<8x32xbf16>, vector<32x32xbf16>, vector<8x32xf32> -> vector<8x32xf32>
    %122 = arith.addf %119, %121 : vector<8x32xf32>
    %123 = math.tanh %122 : vector<8x32xf32>
    %c0_74 = arith.constant 0 : index
    %c576 = arith.constant 576 : index
    %124 = vector.load %arg11[%c0_74, %c576] : memref<8x800xf32, #tpu.memory_space<vmem>>, vector<8x32xf32>
    tpu.vector_store %arg11[%c0_74, %c576], %123 {strides = array<i32>} : memref<8x800xf32, #tpu.memory_space<vmem>>, vector<8x32xf32>,
    %c152 = arith.constant 152 : index
    %c0_75 = arith.constant 0 : index
    %125 = vector.load %arg10[%c152, %c0_75] : memref<200x32xf32, #tpu.memory_space<vmem>>, vector<8x32xf32>
    %126 = arith.truncf %123 : vector<8x32xf32> to vector<8x32xbf16>
    %cst_76 = arith.constant dense<0.000000e+00> : vector<8x32xf32>
    %127 = tpu.matmul %126, %8, %cst_76 {dimension_numbers = #tpu.dot_dimension_numbers<[1], [0], [0], [1], [0, 0, 1, 1], [], []>} : vector<8x32xbf16>, vector<32x32xbf16>, vector<8x32xf32> -> vector<8x32xf32>
    %128 = arith.addf %125, %127 : vector<8x32xf32>
    %129 = math.tanh %128 : vector<8x32xf32>
    %c0_77 = arith.constant 0 : index
    %c608 = arith.constant 608 : index
    %130 = vector.load %arg11[%c0_77, %c608] : memref<8x800xf32, #tpu.memory_space<vmem>>, vector<8x32xf32>
    tpu.vector_store %arg11[%c0_77, %c608], %129 {strides = array<i32>} : memref<8x800xf32, #tpu.memory_space<vmem>>, vector<8x32xf32>,
    %c160_78 = arith.constant 160 : index
    %c0_79 = arith.constant 0 : index
    %131 = vector.load %arg10[%c160_78, %c0_79] : memref<200x32xf32, #tpu.memory_space<vmem>>, vector<8x32xf32>
    %132 = arith.truncf %129 : vector<8x32xf32> to vector<8x32xbf16>
    %cst_80 = arith.constant dense<0.000000e+00> : vector<8x32xf32>
    %133 = tpu.matmul %132, %8, %cst_80 {dimension_numbers = #tpu.dot_dimension_numbers<[1], [0], [0], [1], [0, 0, 1, 1], [], []>} : vector<8x32xbf16>, vector<32x32xbf16>, vector<8x32xf32> -> vector<8x32xf32>
    %134 = arith.addf %131, %133 : vector<8x32xf32>
    %135 = math.tanh %134 : vector<8x32xf32>
    %c0_81 = arith.constant 0 : index
    %c640 = arith.constant 640 : index
    %136 = vector.load %arg11[%c0_81, %c640] : memref<8x800xf32, #tpu.memory_space<vmem>>, vector<8x32xf32>
    tpu.vector_store %arg11[%c0_81, %c640], %135 {strides = array<i32>} : memref<8x800xf32, #tpu.memory_space<vmem>>, vector<8x32xf32>,
    %c168 = arith.constant 168 : index
    %c0_82 = arith.constant 0 : index
    %137 = vector.load %arg10[%c168, %c0_82] : memref<200x32xf32, #tpu.memory_space<vmem>>, vector<8x32xf32>
    %138 = arith.truncf %135 : vector<8x32xf32> to vector<8x32xbf16>
    %cst_83 = arith.constant dense<0.000000e+00> : vector<8x32xf32>
    %139 = tpu.matmul %138, %8, %cst_83 {dimension_numbers = #tpu.dot_dimension_numbers<[1], [0], [0], [1], [0, 0, 1, 1], [], []>} : vector<8x32xbf16>, vector<32x32xbf16>, vector<8x32xf32> -> vector<8x32xf32>
    %140 = arith.addf %137, %139 : vector<8x32xf32>
    %141 = math.tanh %140 : vector<8x32xf32>
    %c0_84 = arith.constant 0 : index
    %c672 = arith.constant 672 : index
    %142 = vector.load %arg11[%c0_84, %c672] : memref<8x800xf32, #tpu.memory_space<vmem>>, vector<8x32xf32>
    tpu.vector_store %arg11[%c0_84, %c672], %141 {strides = array<i32>} : memref<8x800xf32, #tpu.memory_space<vmem>>, vector<8x32xf32>,
    %c176 = arith.constant 176 : index
    %c0_85 = arith.constant 0 : index
    %143 = vector.load %arg10[%c176, %c0_85] : memref<200x32xf32, #tpu.memory_space<vmem>>, vector<8x32xf32>
    %144 = arith.truncf %141 : vector<8x32xf32> to vector<8x32xbf16>
    %cst_86 = arith.constant dense<0.000000e+00> : vector<8x32xf32>
    %145 = tpu.matmul %144, %8, %cst_86 {dimension_numbers = #tpu.dot_dimension_numbers<[1], [0], [0], [1], [0, 0, 1, 1], [], []>} : vector<8x32xbf16>, vector<32x32xbf16>, vector<8x32xf32> -> vector<8x32xf32>
    %146 = arith.addf %143, %145 : vector<8x32xf32>
    %147 = math.tanh %146 : vector<8x32xf32>
    %c0_87 = arith.constant 0 : index
    %c704 = arith.constant 704 : index
    %148 = vector.load %arg11[%c0_87, %c704] : memref<8x800xf32, #tpu.memory_space<vmem>>, vector<8x32xf32>
    tpu.vector_store %arg11[%c0_87, %c704], %147 {strides = array<i32>} : memref<8x800xf32, #tpu.memory_space<vmem>>, vector<8x32xf32>,
    %c184 = arith.constant 184 : index
    %c0_88 = arith.constant 0 : index
    %149 = vector.load %arg10[%c184, %c0_88] : memref<200x32xf32, #tpu.memory_space<vmem>>, vector<8x32xf32>
    %150 = arith.truncf %147 : vector<8x32xf32> to vector<8x32xbf16>
    %cst_89 = arith.constant dense<0.000000e+00> : vector<8x32xf32>
    %151 = tpu.matmul %150, %8, %cst_89 {dimension_numbers = #tpu.dot_dimension_numbers<[1], [0], [0], [1], [0, 0, 1, 1], [], []>} : vector<8x32xbf16>, vector<32x32xbf16>, vector<8x32xf32> -> vector<8x32xf32>
    %152 = arith.addf %149, %151 : vector<8x32xf32>
    %153 = math.tanh %152 : vector<8x32xf32>
    %c0_90 = arith.constant 0 : index
    %c736 = arith.constant 736 : index
    %154 = vector.load %arg11[%c0_90, %c736] : memref<8x800xf32, #tpu.memory_space<vmem>>, vector<8x32xf32>
    tpu.vector_store %arg11[%c0_90, %c736], %153 {strides = array<i32>} : memref<8x800xf32, #tpu.memory_space<vmem>>, vector<8x32xf32>,
    %c192_91 = arith.constant 192 : index
    %c0_92 = arith.constant 0 : index
    %155 = vector.load %arg10[%c192_91, %c0_92] : memref<200x32xf32, #tpu.memory_space<vmem>>, vector<8x32xf32>
    %156 = arith.truncf %153 : vector<8x32xf32> to vector<8x32xbf16>
    %cst_93 = arith.constant dense<0.000000e+00> : vector<8x32xf32>
    %157 = tpu.matmul %156, %8, %cst_93 {dimension_numbers = #tpu.dot_dimension_numbers<[1], [0], [0], [1], [0, 0, 1, 1], [], []>} : vector<8x32xbf16>, vector<32x32xbf16>, vector<8x32xf32> -> vector<8x32xf32>
    %158 = arith.addf %155, %157 : vector<8x32xf32>
    %159 = math.tanh %158 : vector<8x32xf32>
    %c0_94 = arith.constant 0 : index
    %c768 = arith.constant 768 : index
    %160 = vector.load %arg11[%c0_94, %c768] : memref<8x800xf32, #tpu.memory_space<vmem>>, vector<8x32xf32>
    tpu.vector_store %arg11[%c0_94, %c768], %159 {strides = array<i32>} : memref<8x800xf32, #tpu.memory_space<vmem>>, vector<8x32xf32>,
    %c0_95 = arith.constant 0 : index
    %c0_96 = arith.constant 0 : index
    %c0_97 = arith.constant 0 : index
    %161 = vector.load %arg9[%c0_95, %c0_96, %c0_97] : memref<1x8x32xf32, #tpu.memory_space<vmem>>, vector<1x8x32xf32>
    %162 = vector.shape_cast %161 : vector<1x8x32xf32> to vector<8x32xf32>
    %163 = vector.shape_cast %159 : vector<8x32xf32> to vector<1x8x32xf32>
    tpu.vector_store %arg9[%c0_95, %c0_96, %c0_97], %163 {strides = array<i32>} : memref<1x8x32xf32, #tpu.memory_space<vmem>>, vector<1x8x32xf32>,
    %c0_98 = arith.constant 0 : index
    %c0_99 = arith.constant 0 : index
    %164 = vector.load %arg11[%c0_98, %c0_99] : memref<8x800xf32, #tpu.memory_space<vmem>>, vector<8x800xf32>
    %165 = arith.truncf %164 : vector<8x800xf32> to vector<8x800xbf16>
    %c0_100 = arith.constant 0 : index
    %c0_101 = arith.constant 0 : index
    %166 = vector.load %arg5[%c0_100, %c0_101] : memref<800x37xbf16, #tpu.memory_space<vmem>>, vector<800x37xbf16>
    %cst_102 = arith.constant dense<0.000000e+00> : vector<8x37xf32>
    %167 = tpu.matmul %165, %166, %cst_102 {dimension_numbers = #tpu.dot_dimension_numbers<[1], [0], [0], [1], [0, 0, 1, 1], [], []>} : vector<8x800xbf16>, vector<800x37xbf16>, vector<8x37xf32> -> vector<8x37xf32>
    %c0_103 = arith.constant 0 : index
    %c0_104 = arith.constant 0 : index
    %168 = vector.load %arg6[%c0_103, %c0_104] : memref<1x37xf32, #tpu.memory_space<vmem>>, vector<1x37xf32>
    %169 = vector.broadcast %168 : vector<1x37xf32> to vector<8x37xf32>
    %170 = arith.addf %167, %169 : vector<8x37xf32>
    %171 = vector.extract_strided_slice %170 {offsets = [0, 0], sizes = [8, 12], strides = [1, 1]} : vector<8x37xf32> to vector<8x12xf32>
    %c0_105 = arith.constant 0 : index
    %c0_106 = arith.constant 0 : index
    %172 = vector.load %arg7[%c0_105, %c0_106] : memref<8x12xf32, #tpu.memory_space<vmem>>, vector<8x12xf32>
    tpu.vector_store %arg7[%c0_105, %c0_106], %171 {strides = array<i32>} : memref<8x12xf32, #tpu.memory_space<vmem>>, vector<8x12xf32>,
    %173 = vector.extract_strided_slice %170 {offsets = [0, 12], sizes = [8, 25], strides = [1, 1]} : vector<8x37xf32> to vector<8x25xf32>
    %c0_107 = arith.constant 0 : index
    %c0_108 = arith.constant 0 : index
    %174 = vector.load %arg8[%c0_107, %c0_108] : memref<8x25xf32, #tpu.memory_space<vmem>>, vector<8x25xf32>
    tpu.vector_store %arg8[%c0_107, %c0_108], %173 {strides = array<i32>} : memref<8x25xf32, #tpu.memory_space<vmem>>, vector<8x25xf32>,
    return
  }
}

</mosaic_0001>

<llo_original>
// kernel: tpu_custom_call.1
$region0: #{tpu_custom_call.1}
  #allocation0 [shape = 'u32[]', space=smem, size = 0x4, offset = 0x4, fixed_abs, tag = 'smem constant byte address 0x4 - core index']
  #allocation1 [shape = 'u32[72,128]{1,0:T(1,128)}', space=vmem, size = 0x9000, scoped, tag = 'internal scratch']
  #allocation2 [shape = 'f32[200,32]{1,0:T(8,128)}', space=vmem, size = 0x19000, scoped, tag = 'scratch operand']
  #allocation3 [shape = 'f32[8,800]{1,0:T(8,128)}', space=vmem, size = 0x7000, scoped, tag = 'scratch operand']
  %s0 = inlined_call_operand.vmem [shape: f32[200,16], index: 0, kind: input, shape index: {}]
  %s1 = inlined_call_operand.vmem [shape: f32[1,8,32], index: 1, kind: input, shape index: {}]
  %s2 = inlined_call_operand.vmem [shape: bf16[16,32], index: 2, kind: input, shape index: {}]
  %s3 = inlined_call_operand.vmem [shape: bf16[32,32], index: 3, kind: input, shape index: {}]
  %s4 = inlined_call_operand.vmem [shape: f32[1,32], index: 4, kind: input, shape index: {}]
  %s5 = inlined_call_operand.vmem [shape: bf16[800,37], index: 5, kind: input, shape index: {}]
  %s6 = inlined_call_operand.vmem [shape: f32[1,37], index: 6, kind: input, shape index: {}]
  %s7 = inlined_call_operand.hbm [shape: f32[8,12], index: 7, kind: output, shape index: {0}]
  %s8 = inlined_call_operand.hbm [shape: f32[8,25], index: 8, kind: output, shape index: {1}]
  %s9 = inlined_call_operand.hbm [shape: f32[1,8,32], index: 9, kind: output, shape index: {2}]
  %10 = xla_tuple %s7, %s8, %s9
  %s11 = sld [smem:[#allocation0]]
  $region54: #{tpu_custom_call.1} parent=0
    _
  %s13 = ssub.s32 1, %s11
  %s14 = scalar_select 0, %s13, %s11
  $region1: #{tpu_custom_call.1} parent=0
    #allocation4 [shape = 'u8[4096]{0}', space=vmem, size = 0x1000, scoped, tag = 'output window, operand 0, single buffered']
    #allocation5 [shape = 's32[1]{0}', space=sflag, size = 0x4, scoped, tag = 'scoped memory for tpu_custom_call.1']
    #allocation6 [shape = 'u8[4096]{0}', space=vmem, size = 0x1000, scoped, tag = 'output window, operand 1, single buffered']
    #allocation7 [shape = 's32[1]{0}', space=sflag, size = 0x4, scoped, tag = 'scoped memory for tpu_custom_call.1']
    #allocation8 [shape = 'u8[4096]{0}', space=vmem, size = 0x1000, scoped, tag = 'output window, operand 2, single buffered']
    %15 = vsyncpa [#allocation5], 0
    %16 = vsyncpa [#allocation7], 0
    // Predicated region
    $region2: #{tpu_custom_call.1} parent=1 // pred_check
      _
    $region3: #{tpu_custom_call.1} parent=1 // pred_check_branch
      %18 = sbr.rel (0) target = $region5
    $region4: #{tpu_custom_call.1} parent=1 // pred_region
      _
    $region5: #{tpu_custom_call.1} parent=1 // pred_fallthru
      _
    // Predicated region
    $region6: #{tpu_custom_call.1} parent=1 // pred_check
      _
    $region7: #{tpu_custom_call.1} parent=1 // pred_check_branch
      %20 = sbr.rel (0) target = $region9
    $region8: #{tpu_custom_call.1} parent=1 // pred_region
      _
    $region9: #{tpu_custom_call.1} parent=1 // pred_fallthru
      _
    // Predicated region
    $region10: #{tpu_custom_call.1} parent=1 // pred_check
      _
    $region11: #{tpu_custom_call.1} parent=1 // pred_check_branch
      %22 = sbr.rel (0) target = $region13
    $region12: #{tpu_custom_call.1} parent=1 // pred_region
      _
    $region13: #{tpu_custom_call.1} parent=1 // pred_fallthru
      _
    // Predicated region
    $region14: #{tpu_custom_call.1} parent=1 // pred_check
      _
    $region15: #{tpu_custom_call.1} parent=1 // pred_check_branch
      %24 = sbr.rel (0) target = $region17
    $region16: #{tpu_custom_call.1} parent=1 // pred_region
      _
    $region17: #{tpu_custom_call.1} parent=1 // pred_fallthru
      _
    // Predicated region
    $region18: #{tpu_custom_call.1} parent=1 // pred_check
      _
    $region19: #{tpu_custom_call.1} parent=1 // pred_check_branch
      %26 = sbr.rel (0) target = $region21
    $region20: #{tpu_custom_call.1} parent=1 // pred_region
      _
    $region21: #{tpu_custom_call.1} parent=1 // pred_fallthru
      _
    // Predicated region
    $region22: #{tpu_custom_call.1} parent=1 // pred_check
      _
    $region23: #{tpu_custom_call.1} parent=1 // pred_check_branch
      %28 = sbr.rel (0) target = $region25
    $region24: #{tpu_custom_call.1} parent=1 // pred_region
      _
    $region25: #{tpu_custom_call.1} parent=1 // pred_fallthru
      _
    // Predicated region
    $region26: #{tpu_custom_call.1} parent=1 // pred_check
      _
    $region27: #{tpu_custom_call.1} parent=1 // pred_check_branch
      %30 = sbr.rel (0) target = $region29
    $region28: #{tpu_custom_call.1} parent=1 // pred_region
      _
    $region29: #{tpu_custom_call.1} parent=1 // pred_fallthru
      _
    %v32 = vld [vmem:[%s0] sm:$0xff]
    %v33 = vld [vmem:[%s0 + $0x8] sm:$0xff]
    %v34 = vld [vmem:[%s0 + $0x10] sm:$0xff]
    %v35 = vld [vmem:[%s0 + $0x18] sm:$0xff]
    %v36 = vld [vmem:[%s0 + $0x20] sm:$0xff]
    %v37 = vld [vmem:[%s0 + $0x28] sm:$0xff]
    %v38 = vld [vmem:[%s0 + $0x30] sm:$0xff]
    %v39 = vld [vmem:[%s0 + $0x38] sm:$0xff]
    %v40 = vld [vmem:[%s0 + $0x40] sm:$0xff]
    %v41 = vld [vmem:[%s0 + $0x48] sm:$0xff]
    %v42 = vld [vmem:[%s0 + $0x50] sm:$0xff]
    %v43 = vld [vmem:[%s0 + $0x58] sm:$0xff]
    %v44 = vld [vmem:[%s0 + $0x60] sm:$0xff]
    %v45 = vld [vmem:[%s0 + $0x68] sm:$0xff]
    %v46 = vld [vmem:[%s0 + $0x70] sm:$0xff]
    %v47 = vld [vmem:[%s0 + $0x78] sm:$0xff]
    %v48 = vld [vmem:[%s0 + $0x80] sm:$0xff]
    %v49 = vld [vmem:[%s0 + $0x88] sm:$0xff]
    %v50 = vld [vmem:[%s0 + $0x90] sm:$0xff]
    %v51 = vld [vmem:[%s0 + $0x98] sm:$0xff]
    %v52 = vld [vmem:[%s0 + $0xa0] sm:$0xff]
    %v53 = vld [vmem:[%s0 + $0xa8] sm:$0xff]
    %v54 = vld [vmem:[%s0 + $0xb0] sm:$0xff]
    %v55 = vld [vmem:[%s0 + $0xb8] sm:$0xff]
    %v56 = vld [vmem:[%s0 + $0xc0] sm:$0xff]
    %v57 = vpack.c.bf16 %v33, %v32
    %v58 = vpack.c.bf16 %v35, %v34
    %v59 = vpack.c.bf16 %v37, %v36
    %v60 = vpack.c.bf16 %v39, %v38
    %v61 = vpack.c.bf16 %v41, %v40
    %v62 = vpack.c.bf16 %v43, %v42
    %v63 = vpack.c.bf16 %v45, %v44
    %v64 = vpack.c.bf16 %v47, %v46
    %v65 = vpack.c.bf16 %v49, %v48
    %v66 = vpack.c.bf16 %v51, %v50
    %v67 = vpack.c.bf16 %v53, %v52
    %v68 = vpack.c.bf16 %v55, %v54
    %v69 = vpack.c.bf16 %v56, %v56
    %v70 = vld [vmem:[%s2] sm:$0xf]
    %v71 = vld [vmem:[%s2 + $0x4] sm:$0xf]
    %v72 = vld [vmem:[%s4] sm:$0x1]
    %v74 = vperm.slane %v72, 0
    %v78 = vunpack.c.l.b16 %v70
    %v79 = vunpack.c.l.b16 %v71
    %v80 = vpack.c.b16 %v79, %v78
    %vm82 = vcmask 130048
    %v84 = vsel %vm82, %v57, 0
    %v87 = vsel %vm82, %v58, 0
    %v90 = vsel %vm82, %v59, 0
    %v93 = vsel %vm82, %v60, 0
    %v96 = vsel %vm82, %v61, 0
    %v99 = vsel %vm82, %v62, 0
    %v102 = vsel %vm82, %v63, 0
    %v105 = vsel %vm82, %v64, 0
    %v108 = vsel %vm82, %v65, 0
    %v111 = vsel %vm82, %v66, 0
    %v114 = vsel %vm82, %v67, 0
    %v117 = vsel %vm82, %v68, 0
    %v120 = vsel %vm82, %v69, 0
    %122 = vmatpush.bf16.msra.mxu0 0
    %123 = vmatpush.bf16.msra.mxu0 0
    %124 = vmatpush.bf16.msra.mxu0 0
    %125 = vmatpush.bf16.msra.mxu0 0
    %126 = vmatpush.bf16.msra.mxu0 0
    %127 = vmatpush.bf16.msra.mxu0 0
    %128 = vmatpush.bf16.msra.mxu0 0
    %129 = vmatpush.bf16.msra.mxu0 %v80
    %130 = vmatmul.bf16.gmra.mxu0 %v84
    %v131 = vpop.f32.mrf.mxu0
    %v132 = vadd.f32 %v74, %v131
    %v133 = vpop.f32.mrf.mxu0
    %v134 = vadd.f32 %v74, %v133
    %135 = vmatmul.bf16.gmra.mxu0 %v87
    %v136 = vpop.f32.mrf.mxu0
    %v137 = vadd.f32 %v74, %v136
    %v138 = vpop.f32.mrf.mxu0
    %v139 = vadd.f32 %v74, %v138
    %140 = vmatmul.bf16.gmra.mxu0 %v90
    %v141 = vpop.f32.mrf.mxu0
    %v142 = vadd.f32 %v74, %v141
    %v143 = vpop.f32.mrf.mxu0
    %v144 = vadd.f32 %v74, %v143
    %145 = vmatmul.bf16.gmra.mxu0 %v93
    %v146 = vpop.f32.mrf.mxu0
    %v147 = vadd.f32 %v74, %v146
    %v148 = vpop.f32.mrf.mxu0
    %v149 = vadd.f32 %v74, %v148
    %150 = vmatmul.bf16.gmra.mxu0 %v96
    %v151 = vpop.f32.mrf.mxu0
    %v152 = vadd.f32 %v74, %v151
    %v153 = vpop.f32.mrf.mxu0
    %v154 = vadd.f32 %v74, %v153
    %155 = vmatmul.bf16.gmra.mxu0 %v99
    %v156 = vpop.f32.mrf.mxu0
    %v157 = vadd.f32 %v74, %v156
    %v158 = vpop.f32.mrf.mxu0
    %v159 = vadd.f32 %v74, %v158
    %160 = vmatmul.bf16.gmra.mxu0 %v102
    %v161 = vpop.f32.mrf.mxu0
    %v162 = vadd.f32 %v74, %v161
    %v163 = vpop.f32.mrf.mxu0
    %v164 = vadd.f32 %v74, %v163
    %165 = vmatmul.bf16.gmra.mxu0 %v105
    %v166 = vpop.f32.mrf.mxu0
    %v167 = vadd.f32 %v74, %v166
    %v168 = vpop.f32.mrf.mxu0
    %v169 = vadd.f32 %v74, %v168
    %170 = vmatmul.bf16.gmra.mxu0 %v108
    %v171 = vpop.f32.mrf.mxu0
    %v172 = vadd.f32 %v74, %v171
    %v173 = vpop.f32.mrf.mxu0
    %v174 = vadd.f32 %v74, %v173
    %175 = vmatmul.bf16.gmra.mxu0 %v111
    %v176 = vpop.f32.mrf.mxu0
    %v177 = vadd.f32 %v74, %v176
    %v178 = vpop.f32.mrf.mxu0
    %v179 = vadd.f32 %v74, %v178
    %180 = vmatmul.bf16.gmra.mxu0 %v114
    %v181 = vpop.f32.mrf.mxu0
    %v182 = vadd.f32 %v74, %v181
    %v183 = vpop.f32.mrf.mxu0
    %v184 = vadd.f32 %v74, %v183
    %185 = vmatmul.bf16.gmra.mxu0 %v117
    %v186 = vpop.f32.mrf.mxu0
    %v187 = vadd.f32 %v74, %v186
    %v188 = vpop.f32.mrf.mxu0
    %v189 = vadd.f32 %v74, %v188
    %190 = vmatmul.bf16.gmra.mxu0 %v120
    %v191 = vpop.f32.mrf.mxu0
    %v192 = vadd.f32 %v74, %v191
    %v193 = vpop.f32.mrf.mxu0
    %194 = vdwg.mxu0
    %vm195 = vcmask 261120
    %196 = vst.msk [vmem:[#allocation2] sm:$0xff] %vm195, %v132
    %197 = vst.msk [vmem:[#allocation2 + $0x8] sm:$0xff] %vm195, %v134
    %198 = vst.msk [vmem:[#allocation2 + $0x10] sm:$0xff] %vm195, %v137
    %199 = vst.msk [vmem:[#allocation2 + $0x18] sm:$0xff] %vm195, %v139
    %200 = vst.msk [vmem:[#allocation2 + $0x20] sm:$0xff] %vm195, %v142
    %201 = vst.msk [vmem:[#allocation2 + $0x28] sm:$0xff] %vm195, %v144
    %202 = vst.msk [vmem:[#allocation2 + $0x30] sm:$0xff] %vm195, %v147
    %203 = vst.msk [vmem:[#allocation2 + $0x38] sm:$0xff] %vm195, %v149
    %204 = vst.msk [vmem:[#allocation2 + $0x40] sm:$0xff] %vm195, %v152
    %205 = vst.msk [vmem:[#allocation2 + $0x48] sm:$0xff] %vm195, %v154
    %206 = vst.msk [vmem:[#allocation2 + $0x50] sm:$0xff] %vm195, %v157
    %207 = vst.msk [vmem:[#allocation2 + $0x58] sm:$0xff] %vm195, %v159
    %208 = vst.msk [vmem:[#allocation2 + $0x60] sm:$0xff] %vm195, %v162
    %209 = vst.msk [vmem:[#allocation2 + $0x68] sm:$0xff] %vm195, %v164
    %210 = vst.msk [vmem:[#allocation2 + $0x70] sm:$0xff] %vm195, %v167
    %211 = vst.msk [vmem:[#allocation2 + $0x78] sm:$0xff] %vm195, %v169
    %212 = vst.msk [vmem:[#allocation2 + $0x80] sm:$0xff] %vm195, %v172
    %213 = vst.msk [vmem:[#allocation2 + $0x88] sm:$0xff] %vm195, %v174
    %214 = vst.msk [vmem:[#allocation2 + $0x90] sm:$0xff] %vm195, %v177
    %215 = vst.msk [vmem:[#allocation2 + $0x98] sm:$0xff] %vm195, %v179
    %216 = vst.msk [vmem:[#allocation2 + $0xa0] sm:$0xff] %vm195, %v182
    %217 = vst.msk [vmem:[#allocation2 + $0xa8] sm:$0xff] %vm195, %v184
    %218 = vst.msk [vmem:[#allocation2 + $0xb0] sm:$0xff] %vm195, %v187
    %219 = vst.msk [vmem:[#allocation2 + $0xb8] sm:$0xff] %vm195, %v189
    %220 = vst.msk [vmem:[#allocation2 + $0xc0] sm:$0xff] %vm195, %v192
    %v221 = vld [vmem:[%s3] sm:$0xf]
    %v222 = vld [vmem:[%s3 + $0x4] sm:$0xf]
    %v223 = vld [vmem:[%s3 + $0x8] sm:$0xf]
    %v224 = vld [vmem:[%s3 + $0xc] sm:$0xf]
    %v225 = vld [vmem:[%s1] sm:$0xff]
    %v226 = vld [vmem:[#allocation2] sm:$0xff]
    %v227 = vpack.c.bf16 %v225, %v225
    %v232 = vunpack.c.l.b16 %v221
    %v233 = vunpack.c.l.b16 %v222
    %v234 = vunpack.c.l.b16 %v223
    %v235 = vunpack.c.l.b16 %v224
    %v236 = vpack.c.b16 %v233, %v232
    %v237 = vpack.c.b16 %v235, %v234
    %v241 = vsel %vm195, %v227, 0
    %243 = vmatpush.bf16.msra.mxu0 0
    %244 = vmatpush.bf16.msra.mxu0 0
    %245 = vmatpush.bf16.msra.mxu0 0
    %246 = vmatpush.bf16.msra.mxu0 0
    %247 = vmatpush.bf16.msra.mxu0 0
    %248 = vmatpush.bf16.msra.mxu0 0
    %249 = vmatpush.bf16.msra.mxu0 %v237
    %250 = vmatpush.bf16.msra.mxu0 %v236
    %251 = vmatmul.bf16.gmra.mxu0 %v241
    %v252 = vpop.f32.mrf.mxu0
    %v253 = vadd.f32 0.0, %v252
    %v254 = vpop.f32.mrf.mxu0
    %255 = vdwg.mxu0
    %v256 = vadd.f32 %v226, %v253
    %v257 = vtanh.pop %v256
    %258 = vst.msk [vmem:[#allocation3] sm:$0xff] %vm195, %v257
    %v259 = vld [vmem:[#allocation2 + $0x8] sm:$0xff]
    %v260 = vpack.c.bf16 %v257, %v257
    %v262 = vsel %vm195, %v260, 0
    %264 = vmatpush.bf16.msra.mxu0 0
    %265 = vmatpush.bf16.msra.mxu0 0
    %266 = vmatpush.bf16.msra.mxu0 0
    %267 = vmatpush.bf16.msra.mxu0 0
    %268 = vmatpush.bf16.msra.mxu0 0
    %269 = vmatpush.bf16.msra.mxu0 0
    %270 = vmatpush.bf16.msra.mxu0 %v237
    %271 = vmatpush.bf16.msra.mxu0 %v236
    %272 = vmatmul.bf16.gmra.mxu0 %v262
    %v273 = vpop.f32.mrf.mxu0
    %v274 = vadd.f32 0.0, %v273
    %v275 = vpop.f32.mrf.mxu0
    %276 = vdwg.mxu0
    %v277 = vadd.f32 %v259, %v274
    %v278 = vtanh.pop %v277
    %280 = vrot.lane.b32.xlu0 %v278, 32
    %v281 = vpop.permute.xlu0 %280
    %vm283 = vcmask 523520
    %284 = vst.msk [vmem:[#allocation3] sm:$0xff] %vm283, %v281
    %v285 = vld [vmem:[#allocation2 + $0x10] sm:$0xff]
    %v286 = vpack.c.bf16 %v278, %v278
    %v288 = vsel %vm195, %v286, 0
    %290 = vmatpush.bf16.msra.mxu0 0
    %291 = vmatpush.bf16.msra.mxu0 0
    %292 = vmatpush.bf16.msra.mxu0 0
    %293 = vmatpush.bf16.msra.mxu0 0
    %294 = vmatpush.bf16.msra.mxu0 0
    %295 = vmatpush.bf16.msra.mxu0 0
    %296 = vmatpush.bf16.msra.mxu0 %v237
    %297 = vmatpush.bf16.msra.mxu0 %v236
    %298 = vmatmul.bf16.gmra.mxu0 %v288
    %v299 = vpop.f32.mrf.mxu0
    %v300 = vadd.f32 0.0, %v299
    %v301 = vpop.f32.mrf.mxu0
    %302 = vdwg.mxu0
    %v303 = vadd.f32 %v285, %v300
    %v304 = vtanh.pop %v303
    %306 = vrot.lane.b32.xlu0 %v304, 64
    %v307 = vpop.permute.xlu0 %306
    %vm309 = vcmask 785920
    %310 = vst.msk [vmem:[#allocation3] sm:$0xff] %vm309, %v307
    %v311 = vld [vmem:[#allocation2 + $0x18] sm:$0xff]
    %v312 = vpack.c.bf16 %v304, %v304
    %v314 = vsel %vm195, %v312, 0
    %316 = vmatpush.bf16.msra.mxu0 0
    %317 = vmatpush.bf16.msra.mxu0 0
    %318 = vmatpush.bf16.msra.mxu0 0
    %319 = vmatpush.bf16.msra.mxu0 0
    %320 = vmatpush.bf16.msra.mxu0 0
    %321 = vmatpush.bf16.msra.mxu0 0
    %322 = vmatpush.bf16.msra.mxu0 %v237
    %323 = vmatpush.bf16.msra.mxu0 %v236
    %324 = vmatmul.bf16.gmra.mxu0 %v314
    %v325 = vpop.f32.mrf.mxu0
    %v326 = vadd.f32 0.0, %v325
    %v327 = vpop.f32.mrf.mxu0
    %328 = vdwg.mxu0
    %v329 = vadd.f32 %v311, %v326
    %v330 = vtanh.pop %v329
    %332 = vrot.lane.b32.xlu0 %v330, 96
    %v333 = vpop.permute.xlu0 %332
    %vm335 = vcmask 1048320
    %336 = vst.msk [vmem:[#allocation3] sm:$0xff] %vm335, %v333
    %v337 = vld [vmem:[#allocation2 + $0x20] sm:$0xff]
    %v338 = vpack.c.bf16 %v330, %v330
    %v340 = vsel %vm195, %v338, 0
    %342 = vmatpush.bf16.msra.mxu0 0
    %343 = vmatpush.bf16.msra.mxu0 0
    %344 = vmatpush.bf16.msra.mxu0 0
    %345 = vmatpush.bf16.msra.mxu0 0
    %346 = vmatpush.bf16.msra.mxu0 0
    %347 = vmatpush.bf16.msra.mxu0 0
    %348 = vmatpush.bf16.msra.mxu0 %v237
    %349 = vmatpush.bf16.msra.mxu0 %v236
    %350 = vmatmul.bf16.gmra.mxu0 %v340
    %v351 = vpop.f32.mrf.mxu0
    %v352 = vadd.f32 0.0, %v351
    %v353 = vpop.f32.mrf.mxu0
    %354 = vdwg.mxu0
    %v355 = vadd.f32 %v337, %v352
    %v356 = vtanh.pop %v355
    %357 = vst.msk [vmem:[#allocation3 + $0x8] sm:$0xff] %vm195, %v356
    %v358 = vld [vmem:[#allocation2 + $0x28] sm:$0xff]
    %v359 = vpack.c.bf16 %v356, %v356
    %v361 = vsel %vm195, %v359, 0
    %363 = vmatpush.bf16.msra.mxu0 0
    %364 = vmatpush.bf16.msra.mxu0 0
    %365 = vmatpush.bf16.msra.mxu0 0
    %366 = vmatpush.bf16.msra.mxu0 0
    %367 = vmatpush.bf16.msra.mxu0 0
    %368 = vmatpush.bf16.msra.mxu0 0
    %369 = vmatpush.bf16.msra.mxu0 %v237
    %370 = vmatpush.bf16.msra.mxu0 %v236
    %371 = vmatmul.bf16.gmra.mxu0 %v361
    %v372 = vpop.f32.mrf.mxu0
    %v373 = vadd.f32 0.0, %v372
    %v374 = vpop.f32.mrf.mxu0
    %375 = vdwg.mxu0
    %v376 = vadd.f32 %v358, %v373
    %v377 = vtanh.pop %v376
    %379 = vrot.lane.b32.xlu0 %v377, 32
    %v380 = vpop.permute.xlu0 %379
    %382 = vst.msk [vmem:[#allocation3 + $0x8] sm:$0xff] %vm283, %v380
    %v383 = vld [vmem:[#allocation2 + $0x30] sm:$0xff]
    %v384 = vpack.c.bf16 %v377, %v377
    %v386 = vsel %vm195, %v384, 0
    %388 = vmatpush.bf16.msra.mxu0 0
    %389 = vmatpush.bf16.msra.mxu0 0
    %390 = vmatpush.bf16.msra.mxu0 0
    %391 = vmatpush.bf16.msra.mxu0 0
    %392 = vmatpush.bf16.msra.mxu0 0
    %393 = vmatpush.bf16.msra.mxu0 0
    %394 = vmatpush.bf16.msra.mxu0 %v237
    %395 = vmatpush.bf16.msra.mxu0 %v236
    %396 = vmatmul.bf16.gmra.mxu0 %v386
    %v397 = vpop.f32.mrf.mxu0
    %v398 = vadd.f32 0.0, %v397
    %v399 = vpop.f32.mrf.mxu0
    %400 = vdwg.mxu0
    %v401 = vadd.f32 %v383, %v398
    %v402 = vtanh.pop %v401
    %404 = vrot.lane.b32.xlu0 %v402, 64
    %v405 = vpop.permute.xlu0 %404
    %407 = vst.msk [vmem:[#allocation3 + $0x8] sm:$0xff] %vm309, %v405
    %v408 = vld [vmem:[#allocation2 + $0x38] sm:$0xff]
    %v409 = vpack.c.bf16 %v402, %v402
    %v411 = vsel %vm195, %v409, 0
    %413 = vmatpush.bf16.msra.mxu0 0
    %414 = vmatpush.bf16.msra.mxu0 0
    %415 = vmatpush.bf16.msra.mxu0 0
    %416 = vmatpush.bf16.msra.mxu0 0
    %417 = vmatpush.bf16.msra.mxu0 0
    %418 = vmatpush.bf16.msra.mxu0 0
    %419 = vmatpush.bf16.msra.mxu0 %v237
    %420 = vmatpush.bf16.msra.mxu0 %v236
    %421 = vmatmul.bf16.gmra.mxu0 %v411
    %v422 = vpop.f32.mrf.mxu0
    %v423 = vadd.f32 0.0, %v422
    %v424 = vpop.f32.mrf.mxu0
    %425 = vdwg.mxu0
    %v426 = vadd.f32 %v408, %v423
    %v427 = vtanh.pop %v426
    %429 = vrot.lane.b32.xlu0 %v427, 96
    %v430 = vpop.permute.xlu0 %429
    %432 = vst.msk [vmem:[#allocation3 + $0x8] sm:$0xff] %vm335, %v430
    %v433 = vld [vmem:[#allocation2 + $0x40] sm:$0xff]
    %v434 = vpack.c.bf16 %v427, %v427
    %v436 = vsel %vm195, %v434, 0
    %438 = vmatpush.bf16.msra.mxu0 0
    %439 = vmatpush.bf16.msra.mxu0 0
    %440 = vmatpush.bf16.msra.mxu0 0
    %441 = vmatpush.bf16.msra.mxu0 0
    %442 = vmatpush.bf16.msra.mxu0 0
    %443 = vmatpush.bf16.msra.mxu0 0
    %444 = vmatpush.bf16.msra.mxu0 %v237
    %445 = vmatpush.bf16.msra.mxu0 %v236
    %446 = vmatmul.bf16.gmra.mxu0 %v436
    %v447 = vpop.f32.mrf.mxu0
    %v448 = vadd.f32 0.0, %v447
    %v449 = vpop.f32.mrf.mxu0
    %450 = vdwg.mxu0
    %v451 = vadd.f32 %v433, %v448
    %v452 = vtanh.pop %v451
    %453 = vst.msk [vmem:[#allocation3 + $0x10] sm:$0xff] %vm195, %v452
    %v454 = vld [vmem:[#allocation2 + $0x48] sm:$0xff]
    %v455 = vpack.c.bf16 %v452, %v452
    %v457 = vsel %vm195, %v455, 0
    %459 = vmatpush.bf16.msra.mxu0 0
    %460 = vmatpush.bf16.msra.mxu0 0
    %461 = vmatpush.bf16.msra.mxu0 0
    %462 = vmatpush.bf16.msra.mxu0 0
    %463 = vmatpush.bf16.msra.mxu0 0
    %464 = vmatpush.bf16.msra.mxu0 0
    %465 = vmatpush.bf16.msra.mxu0 %v237
    %466 = vmatpush.bf16.msra.mxu0 %v236
    %467 = vmatmul.bf16.gmra.mxu0 %v457
    %v468 = vpop.f32.mrf.mxu0
    %v469 = vadd.f32 0.0, %v468
    %v470 = vpop.f32.mrf.mxu0
    %471 = vdwg.mxu0
    %v472 = vadd.f32 %v454, %v469
    %v473 = vtanh.pop %v472
    %475 = vrot.lane.b32.xlu0 %v473, 32
    %v476 = vpop.permute.xlu0 %475
    %478 = vst.msk [vmem:[#allocation3 + $0x10] sm:$0xff] %vm283, %v476
    %v479 = vld [vmem:[#allocation2 + $0x50] sm:$0xff]
    %v480 = vpack.c.bf16 %v473, %v473
    %v482 = vsel %vm195, %v480, 0
    %484 = vmatpush.bf16.msra.mxu0 0
    %485 = vmatpush.bf16.msra.mxu0 0
    %486 = vmatpush.bf16.msra.mxu0 0
    %487 = vmatpush.bf16.msra.mxu0 0
    %488 = vmatpush.bf16.msra.mxu0 0
    %489 = vmatpush.bf16.msra.mxu0 0
    %490 = vmatpush.bf16.msra.mxu0 %v237
    %491 = vmatpush.bf16.msra.mxu0 %v236
    %492 = vmatmul.bf16.gmra.mxu0 %v482
    %v493 = vpop.f32.mrf.mxu0
    %v494 = vadd.f32 0.0, %v493
    %v495 = vpop.f32.mrf.mxu0
    %496 = vdwg.mxu0
    %v497 = vadd.f32 %v479, %v494
    %v498 = vtanh.pop %v497
    %500 = vrot.lane.b32.xlu0 %v498, 64
    %v501 = vpop.permute.xlu0 %500
    %503 = vst.msk [vmem:[#allocation3 + $0x10] sm:$0xff] %vm309, %v501
    %v504 = vld [vmem:[#allocation2 + $0x58] sm:$0xff]
    %v505 = vpack.c.bf16 %v498, %v498
    %v507 = vsel %vm195, %v505, 0
    %509 = vmatpush.bf16.msra.mxu0 0
    %510 = vmatpush.bf16.msra.mxu0 0
    %511 = vmatpush.bf16.msra.mxu0 0
    %512 = vmatpush.bf16.msra.mxu0 0
    %513 = vmatpush.bf16.msra.mxu0 0
    %514 = vmatpush.bf16.msra.mxu0 0
    %515 = vmatpush.bf16.msra.mxu0 %v237
    %516 = vmatpush.bf16.msra.mxu0 %v236
    %517 = vmatmul.bf16.gmra.mxu0 %v507
    %v518 = vpop.f32.mrf.mxu0
    %v519 = vadd.f32 0.0, %v518
    %v520 = vpop.f32.mrf.mxu0
    %521 = vdwg.mxu0
    %v522 = vadd.f32 %v504, %v519
    %v523 = vtanh.pop %v522
    %525 = vrot.lane.b32.xlu0 %v523, 96
    %v526 = vpop.permute.xlu0 %525
    %528 = vst.msk [vmem:[#allocation3 + $0x10] sm:$0xff] %vm335, %v526
    %v529 = vld [vmem:[#allocation2 + $0x60] sm:$0xff]
    %v530 = vpack.c.bf16 %v523, %v523
    %v532 = vsel %vm195, %v530, 0
    %534 = vmatpush.bf16.msra.mxu0 0
    %535 = vmatpush.bf16.msra.mxu0 0
    %536 = vmatpush.bf16.msra.mxu0 0
    %537 = vmatpush.bf16.msra.mxu0 0
    %538 = vmatpush.bf16.msra.mxu0 0
    %539 = vmatpush.bf16.msra.mxu0 0
    %540 = vmatpush.bf16.msra.mxu0 %v237
    %541 = vmatpush.bf16.msra.mxu0 %v236
    %542 = vmatmul.bf16.gmra.mxu0 %v532
    %v543 = vpop.f32.mrf.mxu0
    %v544 = vadd.f32 0.0, %v543
    %v545 = vpop.f32.mrf.mxu0
    %546 = vdwg.mxu0
    %v547 = vadd.f32 %v529, %v544
    %v548 = vtanh.pop %v547
    %549 = vst.msk [vmem:[#allocation3 + $0x18] sm:$0xff] %vm195, %v548
    %v550 = vld [vmem:[#allocation2 + $0x68] sm:$0xff]
    %v551 = vpack.c.bf16 %v548, %v548
    %v553 = vsel %vm195, %v551, 0
    %555 = vmatpush.bf16.msra.mxu0 0
    %556 = vmatpush.bf16.msra.mxu0 0
    %557 = vmatpush.bf16.msra.mxu0 0
    %558 = vmatpush.bf16.msra.mxu0 0
    %559 = vmatpush.bf16.msra.mxu0 0
    %560 = vmatpush.bf16.msra.mxu0 0
    %561 = vmatpush.bf16.msra.mxu0 %v237
    %562 = vmatpush.bf16.msra.mxu0 %v236
    %563 = vmatmul.bf16.gmra.mxu0 %v553
    %v564 = vpop.f32.mrf.mxu0
    %v565 = vadd.f32 0.0, %v564
    %v566 = vpop.f32.mrf.mxu0
    %567 = vdwg.mxu0
    %v568 = vadd.f32 %v550, %v565
    %v569 = vtanh.pop %v568
    %571 = vrot.lane.b32.xlu0 %v569, 32
    %v572 = vpop.permute.xlu0 %571
    %574 = vst.msk [vmem:[#allocation3 + $0x18] sm:$0xff] %vm283, %v572
    %v575 = vld [vmem:[#allocation2 + $0x70] sm:$0xff]
    %v576 = vpack.c.bf16 %v569, %v569
    %v578 = vsel %vm195, %v576, 0
    %580 = vmatpush.bf16.msra.mxu0 0
    %581 = vmatpush.bf16.msra.mxu0 0
    %582 = vmatpush.bf16.msra.mxu0 0
    %583 = vmatpush.bf16.msra.mxu0 0
    %584 = vmatpush.bf16.msra.mxu0 0
    %585 = vmatpush.bf16.msra.mxu0 0
    %586 = vmatpush.bf16.msra.mxu0 %v237
    %587 = vmatpush.bf16.msra.mxu0 %v236
    %588 = vmatmul.bf16.gmra.mxu0 %v578
    %v589 = vpop.f32.mrf.mxu0
    %v590 = vadd.f32 0.0, %v589
    %v591 = vpop.f32.mrf.mxu0
    %592 = vdwg.mxu0
    %v593 = vadd.f32 %v575, %v590
    %v594 = vtanh.pop %v593
    %596 = vrot.lane.b32.xlu0 %v594, 64
    %v597 = vpop.permute.xlu0 %596
    %599 = vst.msk [vmem:[#allocation3 + $0x18] sm:$0xff] %vm309, %v597
    %v600 = vld [vmem:[#allocation2 + $0x78] sm:$0xff]
    %v601 = vpack.c.bf16 %v594, %v594
    %v603 = vsel %vm195, %v601, 0
    %605 = vmatpush.bf16.msra.mxu0 0
    %606 = vmatpush.bf16.msra.mxu0 0
    %607 = vmatpush.bf16.msra.mxu0 0
    %608 = vmatpush.bf16.msra.mxu0 0
    %609 = vmatpush.bf16.msra.mxu0 0
    %610 = vmatpush.bf16.msra.mxu0 0
    %611 = vmatpush.bf16.msra.mxu0 %v237
    %612 = vmatpush.bf16.msra.mxu0 %v236
    %613 = vmatmul.bf16.gmra.mxu0 %v603
    %v614 = vpop.f32.mrf.mxu0
    %v615 = vadd.f32 0.0, %v614
    %v616 = vpop.f32.mrf.mxu0
    %617 = vdwg.mxu0
    %v618 = vadd.f32 %v600, %v615
    %v619 = vtanh.pop %v618
    %621 = vrot.lane.b32.xlu0 %v619, 96
    %v622 = vpop.permute.xlu0 %621
    %624 = vst.msk [vmem:[#allocation3 + $0x18] sm:$0xff] %vm335, %v622
    %v625 = vld [vmem:[#allocation2 + $0x80] sm:$0xff]
    %v626 = vpack.c.bf16 %v619, %v619
    %v628 = vsel %vm195, %v626, 0
    %630 = vmatpush.bf16.msra.mxu0 0
    %631 = vmatpush.bf16.msra.mxu0 0
    %632 = vmatpush.bf16.msra.mxu0 0
    %633 = vmatpush.bf16.msra.mxu0 0
    %634 = vmatpush.bf16.msra.mxu0 0
    %635 = vmatpush.bf16.msra.mxu0 0
    %636 = vmatpush.bf16.msra.mxu0 %v237
    %637 = vmatpush.bf16.msra.mxu0 %v236
    %638 = vmatmul.bf16.gmra.mxu0 %v628
    %v639 = vpop.f32.mrf.mxu0
    %v640 = vadd.f32 0.0, %v639
    %v641 = vpop.f32.mrf.mxu0
    %642 = vdwg.mxu0
    %v643 = vadd.f32 %v625, %v640
    %v644 = vtanh.pop %v643
    %645 = vst.msk [vmem:[#allocation3 + $0x20] sm:$0xff] %vm195, %v644
    %v646 = vld [vmem:[#allocation2 + $0x88] sm:$0xff]
    %v647 = vpack.c.bf16 %v644, %v644
    %v649 = vsel %vm195, %v647, 0
    %651 = vmatpush.bf16.msra.mxu0 0
    %652 = vmatpush.bf16.msra.mxu0 0
    %653 = vmatpush.bf16.msra.mxu0 0
    %654 = vmatpush.bf16.msra.mxu0 0
    %655 = vmatpush.bf16.msra.mxu0 0
    %656 = vmatpush.bf16.msra.mxu0 0
    %657 = vmatpush.bf16.msra.mxu0 %v237
    %658 = vmatpush.bf16.msra.mxu0 %v236
    %659 = vmatmul.bf16.gmra.mxu0 %v649
    %v660 = vpop.f32.mrf.mxu0
    %v661 = vadd.f32 0.0, %v660
    %v662 = vpop.f32.mrf.mxu0
    %663 = vdwg.mxu0
    %v664 = vadd.f32 %v646, %v661
    %v665 = vtanh.pop %v664
    %667 = vrot.lane.b32.xlu0 %v665, 32
    %v668 = vpop.permute.xlu0 %667
    %670 = vst.msk [vmem:[#allocation3 + $0x20] sm:$0xff] %vm283, %v668
    %v671 = vld [vmem:[#allocation2 + $0x90] sm:$0xff]
    %v672 = vpack.c.bf16 %v665, %v665
    %v674 = vsel %vm195, %v672, 0
    %676 = vmatpush.bf16.msra.mxu0 0
    %677 = vmatpush.bf16.msra.mxu0 0
    %678 = vmatpush.bf16.msra.mxu0 0
    %679 = vmatpush.bf16.msra.mxu0 0
    %680 = vmatpush.bf16.msra.mxu0 0
    %681 = vmatpush.bf16.msra.mxu0 0
    %682 = vmatpush.bf16.msra.mxu0 %v237
    %683 = vmatpush.bf16.msra.mxu0 %v236
    %684 = vmatmul.bf16.gmra.mxu0 %v674
    %v685 = vpop.f32.mrf.mxu0
    %v686 = vadd.f32 0.0, %v685
    %v687 = vpop.f32.mrf.mxu0
    %688 = vdwg.mxu0
    %v689 = vadd.f32 %v671, %v686
    %v690 = vtanh.pop %v689
    %692 = vrot.lane.b32.xlu0 %v690, 64
    %v693 = vpop.permute.xlu0 %692
    %695 = vst.msk [vmem:[#allocation3 + $0x20] sm:$0xff] %vm309, %v693
    %v696 = vld [vmem:[#allocation2 + $0x98] sm:$0xff]
    %v697 = vpack.c.bf16 %v690, %v690
    %v699 = vsel %vm195, %v697, 0
    %701 = vmatpush.bf16.msra.mxu0 0
    %702 = vmatpush.bf16.msra.mxu0 0
    %703 = vmatpush.bf16.msra.mxu0 0
    %704 = vmatpush.bf16.msra.mxu0 0
    %705 = vmatpush.bf16.msra.mxu0 0
    %706 = vmatpush.bf16.msra.mxu0 0
    %707 = vmatpush.bf16.msra.mxu0 %v237
    %708 = vmatpush.bf16.msra.mxu0 %v236
    %709 = vmatmul.bf16.gmra.mxu0 %v699
    %v710 = vpop.f32.mrf.mxu0
    %v711 = vadd.f32 0.0, %v710
    %v712 = vpop.f32.mrf.mxu0
    %713 = vdwg.mxu0
    %v714 = vadd.f32 %v696, %v711
    %v715 = vtanh.pop %v714
    %717 = vrot.lane.b32.xlu0 %v715, 96
    %v718 = vpop.permute.xlu0 %717
    %720 = vst.msk [vmem:[#allocation3 + $0x20] sm:$0xff] %vm335, %v718
    %v721 = vld [vmem:[#allocation2 + $0xa0] sm:$0xff]
    %v722 = vpack.c.bf16 %v715, %v715
    %v724 = vsel %vm195, %v722, 0
    %726 = vmatpush.bf16.msra.mxu0 0
    %727 = vmatpush.bf16.msra.mxu0 0
    %728 = vmatpush.bf16.msra.mxu0 0
    %729 = vmatpush.bf16.msra.mxu0 0
    %730 = vmatpush.bf16.msra.mxu0 0
    %731 = vmatpush.bf16.msra.mxu0 0
    %732 = vmatpush.bf16.msra.mxu0 %v237
    %733 = vmatpush.bf16.msra.mxu0 %v236
    %734 = vmatmul.bf16.gmra.mxu0 %v724
    %v735 = vpop.f32.mrf.mxu0
    %v736 = vadd.f32 0.0, %v735
    %v737 = vpop.f32.mrf.mxu0
    %738 = vdwg.mxu0
    %v739 = vadd.f32 %v721, %v736
    %v740 = vtanh.pop %v739
    %741 = vst.msk [vmem:[#allocation3 + $0x28] sm:$0xff] %vm195, %v740
    %v742 = vld [vmem:[#allocation2 + $0xa8] sm:$0xff]
    %v743 = vpack.c.bf16 %v740, %v740
    %v745 = vsel %vm195, %v743, 0
    %747 = vmatpush.bf16.msra.mxu0 0
    %748 = vmatpush.bf16.msra.mxu0 0
    %749 = vmatpush.bf16.msra.mxu0 0
    %750 = vmatpush.bf16.msra.mxu0 0
    %751 = vmatpush.bf16.msra.mxu0 0
    %752 = vmatpush.bf16.msra.mxu0 0
    %753 = vmatpush.bf16.msra.mxu0 %v237
    %754 = vmatpush.bf16.msra.mxu0 %v236
    %755 = vmatmul.bf16.gmra.mxu0 %v745
    %v756 = vpop.f32.mrf.mxu0
    %v757 = vadd.f32 0.0, %v756
    %v758 = vpop.f32.mrf.mxu0
    %759 = vdwg.mxu0
    %v760 = vadd.f32 %v742, %v757
    %v761 = vtanh.pop %v760
    %763 = vrot.lane.b32.xlu0 %v761, 32
    %v764 = vpop.permute.xlu0 %763
    %766 = vst.msk [vmem:[#allocation3 + $0x28] sm:$0xff] %vm283, %v764
    %v767 = vld [vmem:[#allocation2 + $0xb0] sm:$0xff]
    %v768 = vpack.c.bf16 %v761, %v761
    %v770 = vsel %vm195, %v768, 0
    %772 = vmatpush.bf16.msra.mxu0 0
    %773 = vmatpush.bf16.msra.mxu0 0
    %774 = vmatpush.bf16.msra.mxu0 0
    %775 = vmatpush.bf16.msra.mxu0 0
    %776 = vmatpush.bf16.msra.mxu0 0
    %777 = vmatpush.bf16.msra.mxu0 0
    %778 = vmatpush.bf16.msra.mxu0 %v237
    %779 = vmatpush.bf16.msra.mxu0 %v236
    %780 = vmatmul.bf16.gmra.mxu0 %v770
    %v781 = vpop.f32.mrf.mxu0
    %v782 = vadd.f32 0.0, %v781
    %v783 = vpop.f32.mrf.mxu0
    %784 = vdwg.mxu0
    %v785 = vadd.f32 %v767, %v782
    %v786 = vtanh.pop %v785
    %788 = vrot.lane.b32.xlu0 %v786, 64
    %v789 = vpop.permute.xlu0 %788
    %791 = vst.msk [vmem:[#allocation3 + $0x28] sm:$0xff] %vm309, %v789
    %v792 = vld [vmem:[#allocation2 + $0xb8] sm:$0xff]
    %v793 = vpack.c.bf16 %v786, %v786
    %v795 = vsel %vm195, %v793, 0
    %797 = vmatpush.bf16.msra.mxu0 0
    %798 = vmatpush.bf16.msra.mxu0 0
    %799 = vmatpush.bf16.msra.mxu0 0
    %800 = vmatpush.bf16.msra.mxu0 0
    %801 = vmatpush.bf16.msra.mxu0 0
    %802 = vmatpush.bf16.msra.mxu0 0
    %803 = vmatpush.bf16.msra.mxu0 %v237
    %804 = vmatpush.bf16.msra.mxu0 %v236
    %805 = vmatmul.bf16.gmra.mxu0 %v795
    %v806 = vpop.f32.mrf.mxu0
    %v807 = vadd.f32 0.0, %v806
    %v808 = vpop.f32.mrf.mxu0
    %809 = vdwg.mxu0
    %v810 = vadd.f32 %v792, %v807
    %v811 = vtanh.pop %v810
    %813 = vrot.lane.b32.xlu0 %v811, 96
    %v814 = vpop.permute.xlu0 %813
    %816 = vst.msk [vmem:[#allocation3 + $0x28] sm:$0xff] %vm335, %v814
    %v817 = vld [vmem:[#allocation2 + $0xc0] sm:$0xff]
    %v818 = vpack.c.bf16 %v811, %v811
    %v820 = vsel %vm195, %v818, 0
    %822 = vmatpush.bf16.msra.mxu0 0
    %823 = vmatpush.bf16.msra.mxu0 0
    %824 = vmatpush.bf16.msra.mxu0 0
    %825 = vmatpush.bf16.msra.mxu0 0
    %826 = vmatpush.bf16.msra.mxu0 0
    %827 = vmatpush.bf16.msra.mxu0 0
    %828 = vmatpush.bf16.msra.mxu0 %v237
    %829 = vmatpush.bf16.msra.mxu0 %v236
    %830 = vmatmul.bf16.gmra.mxu0 %v820
    %v831 = vpop.f32.mrf.mxu0
    %v832 = vadd.f32 0.0, %v831
    %v833 = vpop.f32.mrf.mxu0
    %834 = vdwg.mxu0
    %v835 = vadd.f32 %v817, %v832
    %v836 = vtanh.pop %v835
    %837 = vst.msk [vmem:[#allocation3 + $0x30] sm:$0xff] %vm195, %v836
    %838 = vst.msk [vmem:[#allocation8] sm:$0xff] %vm195, %v836
    %v839 = vld [vmem:[#allocation3] sm:$0xff]
    %v840 = vld [vmem:[#allocation3 + $0x8] sm:$0xff]
    %v841 = vld [vmem:[#allocation3 + $0x10] sm:$0xff]
    %v842 = vld [vmem:[#allocation3 + $0x18] sm:$0xff]
    %v843 = vld [vmem:[#allocation3 + $0x20] sm:$0xff]
    %v844 = vld [vmem:[#allocation3 + $0x28] sm:$0xff]
    %v845 = vld [vmem:[#allocation3 + $0x30] sm:$0xff]
    %v846 = vpack.c.bf16 %v839, %v839
    %v847 = vpack.c.bf16 %v840, %v840
    %v848 = vpack.c.bf16 %v841, %v841
    %v849 = vpack.c.bf16 %v842, %v842
    %v850 = vpack.c.bf16 %v843, %v843
    %v851 = vpack.c.bf16 %v844, %v844
    %v852 = vpack.c.bf16 %v845, %v845
    %v853 = vld [vmem:[%s5] sm:$0xf]
    %v854 = vld [vmem:[%s5 + $0x4] sm:$0xf]
    %v855 = vld [vmem:[%s5 + $0x8] sm:$0xf]
    %v856 = vld [vmem:[%s5 + $0xc] sm:$0xf]
    %v857 = vld [vmem:[%s5 + $0x10] sm:$0xf]
    %v858 = vld [vmem:[%s5 + $0x14] sm:$0xf]
    %v859 = vld [vmem:[%s5 + $0x18] sm:$0xf]
    %v860 = vld [vmem:[%s5 + $0x1c] sm:$0xf]
    %v861 = vld [vmem:[%s5 + $0x20] sm:$0xf]
    %v862 = vld [vmem:[%s5 + $0x24] sm:$0xf]
    %v863 = vld [vmem:[%s5 + $0x28] sm:$0xf]
    %v864 = vld [vmem:[%s5 + $0x2c] sm:$0xf]
    %v865 = vld [vmem:[%s5 + $0x30] sm:$0xf]
    %v866 = vld [vmem:[%s5 + $0x34] sm:$0xf]
    %v867 = vld [vmem:[%s5 + $0x38] sm:$0xf]
    %v868 = vld [vmem:[%s5 + $0x3c] sm:$0xf]
    %v869 = vld [vmem:[%s5 + $0x40] sm:$0xf]
    %v870 = vld [vmem:[%s5 + $0x44] sm:$0xf]
    %v871 = vld [vmem:[%s5 + $0x48] sm:$0xf]
    %v872 = vld [vmem:[%s5 + $0x4c] sm:$0xf]
    %v873 = vld [vmem:[%s5 + $0x50] sm:$0xf]
    %v874 = vld [vmem:[%s5 + $0x54] sm:$0xf]
    %v875 = vld [vmem:[%s5 + $0x58] sm:$0xf]
    %v876 = vld [vmem:[%s5 + $0x5c] sm:$0xf]
    %v877 = vld [vmem:[%s5 + $0x60] sm:$0xf]
    %v878 = vld [vmem:[%s5 + $0x64] sm:$0xf]
    %v879 = vld [vmem:[%s5 + $0x68] sm:$0xf]
    %v880 = vld [vmem:[%s5 + $0x6c] sm:$0xf]
    %v881 = vld [vmem:[%s5 + $0x70] sm:$0xf]
    %v882 = vld [vmem:[%s5 + $0x74] sm:$0xf]
    %v883 = vld [vmem:[%s5 + $0x78] sm:$0xf]
    %v884 = vld [vmem:[%s5 + $0x7c] sm:$0xf]
    %v885 = vld [vmem:[%s5 + $0x80] sm:$0xf]
    %v886 = vld [vmem:[%s5 + $0x84] sm:$0xf]
    %v887 = vld [vmem:[%s5 + $0x88] sm:$0xf]
    %v888 = vld [vmem:[%s5 + $0x8c] sm:$0xf]
    %v889 = vld [vmem:[%s5 + $0x90] sm:$0xf]
    %v890 = vld [vmem:[%s5 + $0x94] sm:$0xf]
    %v891 = vld [vmem:[%s5 + $0x98] sm:$0xf]
    %v892 = vld [vmem:[%s5 + $0x9c] sm:$0xf]
    %v893 = vld [vmem:[%s5 + $0xa0] sm:$0xf]
    %v894 = vld [vmem:[%s5 + $0xa4] sm:$0xf]
    %v895 = vld [vmem:[%s5 + $0xa8] sm:$0xf]
    %v896 = vld [vmem:[%s5 + $0xac] sm:$0xf]
    %v897 = vld [vmem:[%s5 + $0xb0] sm:$0xf]
    %v898 = vld [vmem:[%s5 + $0xb4] sm:$0xf]
    %v899 = vld [vmem:[%s5 + $0xb8] sm:$0xf]
    %v900 = vld [vmem:[%s5 + $0xbc] sm:$0xf]
    %v901 = vld [vmem:[%s5 + $0xc0] sm:$0xf]
    %v902 = vld [vmem:[%s5 + $0xc4] sm:$0xf]
    %v903 = vld [vmem:[%s5 + $0xc8] sm:$0xf]
    %v904 = vld [vmem:[%s5 + $0xcc] sm:$0xf]
    %v905 = vld [vmem:[%s5 + $0xd0] sm:$0xf]
    %v906 = vld [vmem:[%s5 + $0xd4] sm:$0xf]
    %v907 = vld [vmem:[%s5 + $0xd8] sm:$0xf]
    %v908 = vld [vmem:[%s5 + $0xdc] sm:$0xf]
    %v909 = vld [vmem:[%s5 + $0xe0] sm:$0xf]
    %v910 = vld [vmem:[%s5 + $0xe4] sm:$0xf]
    %v911 = vld [vmem:[%s5 + $0xe8] sm:$0xf]
    %v912 = vld [vmem:[%s5 + $0xec] sm:$0xf]
    %v913 = vld [vmem:[%s5 + $0xf0] sm:$0xf]
    %v914 = vld [vmem:[%s5 + $0xf4] sm:$0xf]
    %v915 = vld [vmem:[%s5 + $0xf8] sm:$0xf]
    %v916 = vld [vmem:[%s5 + $0xfc] sm:$0xf]
    %v917 = vld [vmem:[%s5 + $0x100] sm:$0xf]
    %v918 = vld [vmem:[%s5 + $0x104] sm:$0xf]
    %v919 = vld [vmem:[%s5 + $0x108] sm:$0xf]
    %v920 = vld [vmem:[%s5 + $0x10c] sm:$0xf]
    %v921 = vld [vmem:[%s5 + $0x110] sm:$0xf]
    %v922 = vld [vmem:[%s5 + $0x114] sm:$0xf]
    %v923 = vld [vmem:[%s5 + $0x118] sm:$0xf]
    %v924 = vld [vmem:[%s5 + $0x11c] sm:$0xf]
    %v925 = vld [vmem:[%s5 + $0x120] sm:$0xf]
    %v926 = vld [vmem:[%s5 + $0x124] sm:$0xf]
    %v927 = vld [vmem:[%s5 + $0x128] sm:$0xf]
    %v928 = vld [vmem:[%s5 + $0x12c] sm:$0xf]
    %v929 = vld [vmem:[%s5 + $0x130] sm:$0xf]
    %v930 = vld [vmem:[%s5 + $0x134] sm:$0xf]
    %v931 = vld [vmem:[%s5 + $0x138] sm:$0xf]
    %v932 = vld [vmem:[%s5 + $0x13c] sm:$0xf]
    %v933 = vld [vmem:[%s5 + $0x140] sm:$0xf]
    %v934 = vld [vmem:[%s5 + $0x144] sm:$0xf]
    %v935 = vld [vmem:[%s5 + $0x148] sm:$0xf]
    %v936 = vld [vmem:[%s5 + $0x14c] sm:$0xf]
    %v937 = vld [vmem:[%s5 + $0x150] sm:$0xf]
    %v938 = vld [vmem:[%s5 + $0x154] sm:$0xf]
    %v939 = vld [vmem:[%s5 + $0x158] sm:$0xf]
    %v940 = vld [vmem:[%s5 + $0x15c] sm:$0xf]
    %v941 = vld [vmem:[%s5 + $0x160] sm:$0xf]
    %v942 = vld [vmem:[%s5 + $0x164] sm:$0xf]
    %v943 = vld [vmem:[%s5 + $0x168] sm:$0xf]
    %v944 = vld [vmem:[%s5 + $0x16c] sm:$0xf]
    %v945 = vld [vmem:[%s5 + $0x170] sm:$0xf]
    %v946 = vld [vmem:[%s5 + $0x174] sm:$0xf]
    %v947 = vld [vmem:[%s5 + $0x178] sm:$0xf]
    %v948 = vld [vmem:[%s5 + $0x17c] sm:$0xf]
    %v949 = vld [vmem:[%s5 + $0x180] sm:$0xf]
    %v950 = vld [vmem:[%s5 + $0x184] sm:$0xf]
    %v951 = vld [vmem:[%s5 + $0x188] sm:$0xf]
    %v952 = vld [vmem:[%s5 + $0x18c] sm:$0xf]
    %v953 = vld [vmem:[%s6] sm:$0x1]
    %v955 = vperm.slane %v953, 0
    %v1057 = vunpack.c.l.b16 %v853
    %v1058 = vunpack.c.l.b16 %v854
    %v1059 = vunpack.c.l.b16 %v855
    %v1060 = vunpack.c.l.b16 %v856
    %v1061 = vunpack.c.l.b16 %v857
    %v1062 = vunpack.c.l.b16 %v858
    %v1063 = vunpack.c.l.b16 %v859
    %v1064 = vunpack.c.l.b16 %v860
    %v1065 = vunpack.c.l.b16 %v861
    %v1066 = vunpack.c.l.b16 %v862
    %v1067 = vunpack.c.l.b16 %v863
    %v1068 = vunpack.c.l.b16 %v864
    %v1069 = vunpack.c.l.b16 %v865
    %v1070 = vunpack.c.l.b16 %v866
    %v1071 = vunpack.c.l.b16 %v867
    %v1072 = vunpack.c.l.b16 %v868
    %v1073 = vunpack.c.l.b16 %v869
    %v1074 = vunpack.c.l.b16 %v870
    %v1075 = vunpack.c.l.b16 %v871
    %v1076 = vunpack.c.l.b16 %v872
    %v1077 = vunpack.c.l.b16 %v873
    %v1078 = vunpack.c.l.b16 %v874
    %v1079 = vunpack.c.l.b16 %v875
    %v1080 = vunpack.c.l.b16 %v876
    %v1081 = vunpack.c.l.b16 %v877
    %v1082 = vunpack.c.l.b16 %v878
    %v1083 = vunpack.c.l.b16 %v879
    %v1084 = vunpack.c.l.b16 %v880
    %v1085 = vunpack.c.l.b16 %v881
    %v1086 = vunpack.c.l.b16 %v882
    %v1087 = vunpack.c.l.b16 %v883
    %v1088 = vunpack.c.l.b16 %v884
    %v1089 = vunpack.c.l.b16 %v885
    %v1090 = vunpack.c.l.b16 %v886
    %v1091 = vunpack.c.l.b16 %v887
    %v1092 = vunpack.c.l.b16 %v888
    %v1093 = vunpack.c.l.b16 %v889
    %v1094 = vunpack.c.l.b16 %v890
    %v1095 = vunpack.c.l.b16 %v891
    %v1096 = vunpack.c.l.b16 %v892
    %v1097 = vunpack.c.l.b16 %v893
    %v1098 = vunpack.c.l.b16 %v894
    %v1099 = vunpack.c.l.b16 %v895
    %v1100 = vunpack.c.l.b16 %v896
    %v1101 = vunpack.c.l.b16 %v897
    %v1102 = vunpack.c.l.b16 %v898
    %v1103 = vunpack.c.l.b16 %v899
    %v1104 = vunpack.c.l.b16 %v900
    %v1105 = vunpack.c.l.b16 %v901
    %v1106 = vunpack.c.l.b16 %v902
    %v1107 = vunpack.c.l.b16 %v903
    %v1108 = vunpack.c.l.b16 %v904
    %v1109 = vunpack.c.l.b16 %v905
    %v1110 = vunpack.c.l.b16 %v906
    %v1111 = vunpack.c.l.b16 %v907
    %v1112 = vunpack.c.l.b16 %v908
    %v1113 = vunpack.c.l.b16 %v909
    %v1114 = vunpack.c.l.b16 %v910
    %v1115 = vunpack.c.l.b16 %v911
    %v1116 = vunpack.c.l.b16 %v912
    %v1117 = vunpack.c.l.b16 %v913
    %v1118 = vunpack.c.l.b16 %v914
    %v1119 = vunpack.c.l.b16 %v915
    %v1120 = vunpack.c.l.b16 %v916
    %v1121 = vunpack.c.l.b16 %v917
    %v1122 = vunpack.c.l.b16 %v918
    %v1123 = vunpack.c.l.b16 %v919
    %v1124 = vunpack.c.l.b16 %v920
    %v1125 = vunpack.c.l.b16 %v921
    %v1126 = vunpack.c.l.b16 %v922
    %v1127 = vunpack.c.l.b16 %v923
    %v1128 = vunpack.c.l.b16 %v924
    %v1129 = vunpack.c.l.b16 %v925
    %v1130 = vunpack.c.l.b16 %v926
    %v1131 = vunpack.c.l.b16 %v927
    %v1132 = vunpack.c.l.b16 %v928
    %v1133 = vunpack.c.l.b16 %v929
    %v1134 = vunpack.c.l.b16 %v930
    %v1135 = vunpack.c.l.b16 %v931
    %v1136 = vunpack.c.l.b16 %v932
    %v1137 = vunpack.c.l.b16 %v933
    %v1138 = vunpack.c.l.b16 %v934
    %v1139 = vunpack.c.l.b16 %v935
    %v1140 = vunpack.c.l.b16 %v936
    %v1141 = vunpack.c.l.b16 %v937
    %v1142 = vunpack.c.l.b16 %v938
    %v1143 = vunpack.c.l.b16 %v939
    %v1144 = vunpack.c.l.b16 %v940
    %v1145 = vunpack.c.l.b16 %v941
    %v1146 = vunpack.c.l.b16 %v942
    %v1147 = vunpack.c.l.b16 %v943
    %v1148 = vunpack.c.l.b16 %v944
    %v1149 = vunpack.c.l.b16 %v945
    %v1150 = vunpack.c.l.b16 %v946
    %v1151 = vunpack.c.l.b16 %v947
    %v1152 = vunpack.c.l.b16 %v948
    %v1153 = vunpack.c.l.b16 %v949
    %v1154 = vunpack.c.l.b16 %v950
    %v1155 = vunpack.c.l.b16 %v951
    %v1156 = vunpack.c.l.b16 %v952
    %v1157 = vpack.c.b16 %v1058, %v1057
    %v1158 = vpack.c.b16 %v1060, %v1059
    %v1159 = vpack.c.b16 %v1062, %v1061
    %v1160 = vpack.c.b16 %v1064, %v1063
    %v1161 = vpack.c.b16 %v1066, %v1065
    %v1162 = vpack.c.b16 %v1068, %v1067
    %v1163 = vpack.c.b16 %v1070, %v1069
    %v1164 = vpack.c.b16 %v1072, %v1071
    %v1165 = vpack.c.b16 %v1074, %v1073
    %v1166 = vpack.c.b16 %v1076, %v1075
    %v1167 = vpack.c.b16 %v1078, %v1077
    %v1168 = vpack.c.b16 %v1080, %v1079
    %v1169 = vpack.c.b16 %v1082, %v1081
    %v1170 = vpack.c.b16 %v1084, %v1083
    %v1171 = vpack.c.b16 %v1086, %v1085
    %v1172 = vpack.c.b16 %v1088, %v1087
    %v1173 = vpack.c.b16 %v1090, %v1089
    %v1174 = vpack.c.b16 %v1092, %v1091
    %v1175 = vpack.c.b16 %v1094, %v1093
    %v1176 = vpack.c.b16 %v1096, %v1095
    %v1177 = vpack.c.b16 %v1098, %v1097
    %v1178 = vpack.c.b16 %v1100, %v1099
    %v1179 = vpack.c.b16 %v1102, %v1101
    %v1180 = vpack.c.b16 %v1104, %v1103
    %v1181 = vpack.c.b16 %v1106, %v1105
    %v1182 = vpack.c.b16 %v1108, %v1107
    %v1183 = vpack.c.b16 %v1110, %v1109
    %v1184 = vpack.c.b16 %v1112, %v1111
    %v1185 = vpack.c.b16 %v1114, %v1113
    %v1186 = vpack.c.b16 %v1116, %v1115
    %v1187 = vpack.c.b16 %v1118, %v1117
    %v1188 = vpack.c.b16 %v1120, %v1119
    %v1189 = vpack.c.b16 %v1122, %v1121
    %v1190 = vpack.c.b16 %v1124, %v1123
    %v1191 = vpack.c.b16 %v1126, %v1125
    %v1192 = vpack.c.b16 %v1128, %v1127
    %v1193 = vpack.c.b16 %v1130, %v1129
    %v1194 = vpack.c.b16 %v1132, %v1131
    %v1195 = vpack.c.b16 %v1134, %v1133
    %v1196 = vpack.c.b16 %v1136, %v1135
    %v1197 = vpack.c.b16 %v1138, %v1137
    %v1198 = vpack.c.b16 %v1140, %v1139
    %v1199 = vpack.c.b16 %v1142, %v1141
    %v1200 = vpack.c.b16 %v1144, %v1143
    %v1201 = vpack.c.b16 %v1146, %v1145
    %v1202 = vpack.c.b16 %v1148, %v1147
    %v1203 = vpack.c.b16 %v1150, %v1149
    %v1204 = vpack.c.b16 %v1152, %v1151
    %v1205 = vpack.c.b16 %v1154, %v1153
    %v1206 = vpack.c.b16 %v1156, %v1155
    %v1258 = vsel %vm195, %v852, 0
    %1260 = vmatpush.bf16.msra.mxu0 %v1164
    %1261 = vmatpush.bf16.msra.mxu0 %v1163
    %1262 = vmatpush.bf16.msra.mxu0 %v1162
    %1263 = vmatpush.bf16.msra.mxu0 %v1161
    %1264 = vmatpush.bf16.msra.mxu0 %v1160
    %1265 = vmatpush.bf16.msra.mxu0 %v1159
    %1266 = vmatpush.bf16.msra.mxu0 %v1158
    %1267 = vmatpush.bf16.msra.mxu0 %v1157
    %1268 = vmatmul.bf16.gmra.mxu0 %v846
    %v1269 = vpop.f32.mrf.mxu0
    %v1270 = vadd.f32 %v955, %v1269
    %v1271 = vpop.f32.mrf.mxu0
    %1272 = vdwg.mxu0
    %1273 = vmatpush.bf16.msra.mxu0 %v1172
    %1274 = vmatpush.bf16.msra.mxu0 %v1171
    %1275 = vmatpush.bf16.msra.mxu0 %v1170
    %1276 = vmatpush.bf16.msra.mxu0 %v1169
    %1277 = vmatpush.bf16.msra.mxu0 %v1168
    %1278 = vmatpush.bf16.msra.mxu0 %v1167
    %1279 = vmatpush.bf16.msra.mxu0 %v1166
    %1280 = vmatpush.bf16.msra.mxu0 %v1165
    %1281 = vmatmul.bf16.gmra.mxu0 %v847
    %v1282 = vpop.f32.mrf.mxu0
    %v1283 = vadd.f32 %v1270, %v1282
    %v1284 = vpop.f32.mrf.mxu0
    %1285 = vdwg.mxu0
    %1286 = vmatpush.bf16.msra.mxu0 %v1180
    %1287 = vmatpush.bf16.msra.mxu0 %v1179
    %1288 = vmatpush.bf16.msra.mxu0 %v1178
    %1289 = vmatpush.bf16.msra.mxu0 %v1177
    %1290 = vmatpush.bf16.msra.mxu0 %v1176
    %1291 = vmatpush.bf16.msra.mxu0 %v1175
    %1292 = vmatpush.bf16.msra.mxu0 %v1174
    %1293 = vmatpush.bf16.msra.mxu0 %v1173
    %1294 = vmatmul.bf16.gmra.mxu0 %v848
    %v1295 = vpop.f32.mrf.mxu0
    %v1296 = vadd.f32 %v1283, %v1295
    %v1297 = vpop.f32.mrf.mxu0
    %1298 = vdwg.mxu0
    %1299 = vmatpush.bf16.msra.mxu0 %v1188
    %1300 = vmatpush.bf16.msra.mxu0 %v1187
    %1301 = vmatpush.bf16.msra.mxu0 %v1186
    %1302 = vmatpush.bf16.msra.mxu0 %v1185
    %1303 = vmatpush.bf16.msra.mxu0 %v1184
    %1304 = vmatpush.bf16.msra.mxu0 %v1183
    %1305 = vmatpush.bf16.msra.mxu0 %v1182
    %1306 = vmatpush.bf16.msra.mxu0 %v1181
    %1307 = vmatmul.bf16.gmra.mxu0 %v849
    %v1308 = vpop.f32.mrf.mxu0
    %v1309 = vadd.f32 %v1296, %v1308
    %v1310 = vpop.f32.mrf.mxu0
    %1311 = vdwg.mxu0
    %1312 = vmatpush.bf16.msra.mxu0 %v1196
    %1313 = vmatpush.bf16.msra.mxu0 %v1195
    %1314 = vmatpush.bf16.msra.mxu0 %v1194
    %1315 = vmatpush.bf16.msra.mxu0 %v1193
    %1316 = vmatpush.bf16.msra.mxu0 %v1192
    %1317 = vmatpush.bf16.msra.mxu0 %v1191
    %1318 = vmatpush.bf16.msra.mxu0 %v1190
    %1319 = vmatpush.bf16.msra.mxu0 %v1189
    %1320 = vmatmul.bf16.gmra.mxu0 %v850
    %v1321 = vpop.f32.mrf.mxu0
    %v1322 = vadd.f32 %v1309, %v1321
    %v1323 = vpop.f32.mrf.mxu0
    %1324 = vdwg.mxu0
    %1325 = vmatpush.bf16.msra.mxu0 %v1204
    %1326 = vmatpush.bf16.msra.mxu0 %v1203
    %1327 = vmatpush.bf16.msra.mxu0 %v1202
    %1328 = vmatpush.bf16.msra.mxu0 %v1201
    %1329 = vmatpush.bf16.msra.mxu0 %v1200
    %1330 = vmatpush.bf16.msra.mxu0 %v1199
    %1331 = vmatpush.bf16.msra.mxu0 %v1198
    %1332 = vmatpush.bf16.msra.mxu0 %v1197
    %1333 = vmatmul.bf16.gmra.mxu0 %v851
    %v1334 = vpop.f32.mrf.mxu0
    %v1335 = vadd.f32 %v1322, %v1334
    %v1336 = vpop.f32.mrf.mxu0
    %1337 = vdwg.mxu0
    %1338 = vmatpush.bf16.msra.mxu0 0
    %1339 = vmatpush.bf16.msra.mxu0 0
    %1340 = vmatpush.bf16.msra.mxu0 0
    %1341 = vmatpush.bf16.msra.mxu0 0
    %1342 = vmatpush.bf16.msra.mxu0 0
    %1343 = vmatpush.bf16.msra.mxu0 0
    %1344 = vmatpush.bf16.msra.mxu0 %v1206
    %1345 = vmatpush.bf16.msra.mxu0 %v1205
    %1346 = vmatmul.bf16.gmra.mxu0 %v1258
    %v1347 = vpop.f32.mrf.mxu0
    %v1348 = vadd.f32 %v1335, %v1347
    %v1349 = vpop.f32.mrf.mxu0
    %1350 = vdwg.mxu0
    %vm1351 = vcmask 97280
    %1352 = vst.msk [vmem:[#allocation4] sm:$0xff] %vm1351, %v1348
    %1354 = vrot.lane.b32.xlu0 %v1348, 116
    %v1355 = vpop.permute.xlu0 %1354
    %vm1357 = vcmask 203776
    %1358 = vst.msk [vmem:[#allocation6] sm:$0xff] %vm1357, %v1355
    // Predicated region
    $region30: #{tpu_custom_call.1} parent=1 // pred_check
      _
    $region31: #{tpu_custom_call.1} parent=1 // pred_check_branch
      %1360 = sbr.rel (0) target = $region33
    $region32: #{tpu_custom_call.1} parent=1 // pred_region
      %1362 = vsyncadd [#allocation5], 0
      %s1364 = sshll.u32 [#allocation4], 4
      %s1365 = int_to_ptr.vmem [resolvable:$true] %s1364
      %s1366 = sshll.u32 %s7, 4
      %s1367 = int_to_ptr.hbm [resolvable:$true] %s1366
      %1369 = dma.vmem_to_hbm [thread:$0]  %s1365, 128, %s1367, [#allocation5]
    $region33: #{tpu_custom_call.1} parent=1 // pred_fallthru
      _
    // Predicated region
    $region34: #{tpu_custom_call.1} parent=1 // pred_check
      _
    $region35: #{tpu_custom_call.1} parent=1 // pred_check_branch
      %1371 = sbr.rel (0) target = $region37
    $region36: #{tpu_custom_call.1} parent=1 // pred_region
      %1373 = vsyncadd [#allocation7], 0
      %s1375 = sshll.u32 [#allocation6], 4
      %s1376 = int_to_ptr.vmem [resolvable:$true] %s1375
      %s1377 = sshll.u32 %s8, 4
      %s1378 = int_to_ptr.hbm [resolvable:$true] %s1377
      %1380 = dma.vmem_to_hbm [thread:$0]  %s1376, 128, %s1378, [#allocation7]
    $region37: #{tpu_custom_call.1} parent=1 // pred_fallthru
      _
    // Predicated region
    $region38: #{tpu_custom_call.1} parent=1 // pred_check
      _
    $region39: #{tpu_custom_call.1} parent=1 // pred_check_branch
      %1382 = sbr.rel (0) target = $region41
    $region40: #{tpu_custom_call.1} parent=1 // pred_region
      %1384 = vsyncadd [#allocation7], 0
      %s1386 = sshll.u32 [#allocation8], 4
      %s1387 = int_to_ptr.vmem [resolvable:$true] %s1386
      %s1388 = sshll.u32 %s9, 4
      %s1389 = int_to_ptr.hbm [resolvable:$true] %s1388
      %1391 = dma.vmem_to_hbm [thread:$0]  %s1387, 128, %s1389, [#allocation7]
    $region41: #{tpu_custom_call.1} parent=1 // pred_fallthru
      _
    // Predicated region
    $region42: #{tpu_custom_call.1} parent=1 // pred_check
      _
    $region43: #{tpu_custom_call.1} parent=1 // pred_check_branch
      %1393 = sbr.rel (0) target = $region45
    $region44: #{tpu_custom_call.1} parent=1 // pred_region
      %1395 = dma.done [#allocation5], 128
    $region45: #{tpu_custom_call.1} parent=1 // pred_fallthru
      _
    // Predicated region
    $region46: #{tpu_custom_call.1} parent=1 // pred_check
      _
    $region47: #{tpu_custom_call.1} parent=1 // pred_check_branch
      %1397 = sbr.rel (0) target = $region49
    $region48: #{tpu_custom_call.1} parent=1 // pred_region
      %1399 = dma.done [#allocation7], 128
    $region49: #{tpu_custom_call.1} parent=1 // pred_fallthru
      _
    // Predicated region
    $region50: #{tpu_custom_call.1} parent=1 // pred_check
      _
    $region51: #{tpu_custom_call.1} parent=1 // pred_check_branch
      %1401 = sbr.rel (0) target = $region53
    $region52: #{tpu_custom_call.1} parent=1 // pred_region
      %1403 = dma.done [#allocation7], 128
    $region53: #{tpu_custom_call.1} parent=1 // pred_fallthru
      _
    %1404 = vsyncpa [#allocation5], 1
    %1405 = vsyncpa [#allocation7], 1

</llo_original>
